<compile_context>
chip_gen: v7x
topology: tpu7x:2x2x1
jax: 0.10.0
libtpu: 0.0.40
codegen_flags: <defaults>
</compile_context>

<pallas_src>
import math

import jax
import jax.numpy as jnp
from jax.experimental import pallas as pl
from jax.experimental.pallas import tpu as pltpu


def _round_up(x, m):
    return ((x + m - 1) // m) * m


def _sublane_multiple(dtype):
    # f32 -> 8, bf16 -> 16, int8/fp8 -> 32 (sub-32-bit dtypes pack along sublanes).
    return max(8, 32 // jnp.dtype(dtype).itemsize)


# PyTorch nn.GELU(approximate='tanh') with folded constants.
_GELU_C0 = math.sqrt(2.0 / math.pi)
_GELU_C1 = _GELU_C0 * 0.044715


def _gelu_tanh(x):
    return 0.5 * x * (1.0 + jnp.tanh(x * (_GELU_C0 + _GELU_C1 * x * x)))


def mlp_kernel(x_ref, w1_ref, b1_ref, w2_ref, b2_ref, o_ref, acc_ref):
    # Grid: (i over M tiles ["parallel"], h over H slabs ["arbitrary"]).
    # x: (TM, Dp), w1: (Dp, TH), b1: (1, TH), w2: (TH, Dp), b2: (1, Dp)
    h = pl.program_id(1)

    @pl.when(h == 0)
    def _():
        acc_ref[...] = jnp.zeros_like(acc_ref)

    # Per-slab hidden: native-dtype MXU operands, f32 accumulation + epilogue.
    hid = jnp.dot(x_ref[...], w1_ref[...], preferred_element_type=jnp.float32)
    hid = hid + b1_ref[...].astype(jnp.float32)
    g = _gelu_tanh(hid).astype(w2_ref.dtype)          # operand dtype for 2nd dot
    acc_ref[...] += jnp.dot(g, w2_ref[...], preferred_element_type=jnp.float32)

    @pl.when(h == pl.num_programs(1) - 1)
    def _():
        o_ref[...] = (acc_ref[...] + b2_ref[...].astype(jnp.float32)).astype(
            o_ref.dtype)


def prepare_mlp_params(w1, b1, w2, b2, *, th=512, param_dtype=None):
    """Pad (and optionally cast) the weights ONCE, outside the per-call path.

    w1: (D, H), b1: (H,), w2: (H, D), b2: (D,) with H = 4*D for GPT-style MLP.
    Feature dims are zero-padded to lane-dense multiples of 128; H is further
    padded to a multiple of the slab width TH so the H grid axis divides evenly
    (padded columns/rows are zero and contribute nothing).
    """
    D, H = w1.shape
    Dp = _round_up(D, 128)
    Hp = _round_up(H, 128)
    # TH: multiple of 256 preferred for the v6e/v7x 2x(256x256) MXU when H is
    # large; clamp to Hp for small configs.
    TH = min(th, Hp)
    Hp = _round_up(Hp, TH)
    dt = param_dtype if param_dtype is not None else w1.dtype

    w1p = jnp.pad(w1, ((0, Dp - D), (0, Hp - H))).astype(dt)
    b1p = jnp.pad(b1, (0, Hp - H)).reshape(1, Hp).astype(dt)
    w2p = jnp.pad(w2, ((0, Hp - H), (0, Dp - D))).astype(dt)
    b2p = jnp.pad(b2, (0, Dp - D)).reshape(1, Dp).astype(dt)
    return dict(w1=w1p, b1=b1p, w2=w2p, b2=b2p,
                D=D, H=H, Dp=Dp, Hp=Hp, TH=TH)


def mlp_pallas(x, params, *, tm=256):
    """x: (B, T, D). params: output of prepare_mlp_params."""
    B, T, D = x.shape
    assert D == params["D"], "input feature dim does not match prepared params"
    Dp, Hp, TH = params["Dp"], params["Hp"], params["TH"]
    H = params["H"]
    w1p, b1p, w2p, b2p = params["w1"], params["b1"], params["w2"], params["b2"]

    M = B * T
    sub = _sublane_multiple(x.dtype)

    # Token tile: dtype-correct sublane multiple; prefer >= 2 tiles so both
    # v7x TensorCores get work (no effect on single-TC v5e/v6e).
    TM = min(tm, _round_up(M, sub))
    if _round_up(M, TM) // TM < 2 and M > sub:
        TM = max(sub, _round_up((M + 1) // 2, sub))
    Mp = _round_up(M, TM)

    x2d = x.reshape(M, D)
    if (Mp, Dp) != (M, D):
        x2d = jnp.pad(x2d, ((0, Mp - M), (0, Dp - D)))

    x_is = jnp.dtype(x.dtype).itemsize
    w_is = jnp.dtype(w1p.dtype).itemsize

    # Real VMEM footprint: double-buffered activation/output tiles and weight
    # slabs, the f32 accumulator scratch, and the (TM, TH) hidden intermediate
    # (f32 + its cast copy) that BlockSpec accounting does not see.
    footprint = (
        2 * TM * Dp * x_is            # x tile (double-buffered)
        + 2 * Dp * TH * w_is          # w1 slab
        + 2 * 1 * TH * w_is           # b1 slab
        + 2 * TH * Dp * w_is          # w2 slab
        + 2 * 1 * Dp * w_is           # b2
        + 2 * TM * Dp * x_is          # out tile
        + TM * Dp * 4                 # f32 accumulator scratch
        + TM * TH * 4 + TM * TH * w_is  # hidden intermediate + cast copy
    )
    vmem_limit = min(64 << 20, max(16 << 20, 2 * footprint + (2 << 20)))

    out_dtype = x.dtype
    cost = pl.CostEstimate(
        flops=4 * M * D * H,                 # two matmuls (unpadded)
        transcendentals=M * H,               # one tanh per hidden activation
        bytes_accessed=(x2d.size * x_is
                        + w1p.size * w_is + b1p.size * w_is
                        + w2p.size * w_is + b2p.size * w_is
                        + Mp * Dp * jnp.dtype(out_dtype).itemsize),
    )

    out = pl.pallas_call(
        mlp_kernel,
        out_shape=jax.ShapeDtypeStruct((Mp, Dp), out_dtype),
        grid_spec=pltpu.PrefetchScalarGridSpec(
            num_scalar_prefetch=0,
            grid=(Mp // TM, Hp // TH),
            in_specs=[
                pl.BlockSpec((TM, Dp), lambda i, h: (i, 0)),   # x tile
                pl.BlockSpec((Dp, TH), lambda i, h: (0, h)),   # w1 slab (streamed)
                pl.BlockSpec((1, TH), lambda i, h: (0, h)),    # b1 slab
                pl.BlockSpec((TH, Dp), lambda i, h: (h, 0)),   # w2 slab (streamed)
                pl.BlockSpec((1, Dp), lambda i, h: (0, 0)),    # b2
            ],
            out_specs=pl.BlockSpec((TM, Dp), lambda i, h: (i, 0)),
            scratch_shapes=[pltpu.VMEM((TM, Dp), jnp.float32)],
        ),
        compiler_params=pltpu.CompilerParams(
            dimension_semantics=("parallel", "arbitrary"),
            vmem_limit_bytes=int(vmem_limit),
        ),
        cost_estimate=cost,
    )(x2d, w1p, b1p, w2p, b2p)

    return out[:M, :D].reshape(B, T, D)


def mlp_reference(x, w1, b1, w2, b2):
    h = _gelu_tanh(x @ w1 + b1)
    return h @ w2 + b2


if __name__ == "__main__":
    # config: n_embd = 32 -> hidden = 4 * 32 = 128; batch = 2, seq = 256
    # (M = 512 gives a 2-step "parallel" M grid, exercising the pipeline and
    # both TensorCores on v7x).
    B, T, n_embd = 2, 256, 32
    hidden = 4 * n_embd

    key = jax.random.PRNGKey(0)
    kx, k1, k2, k3, k4 = jax.random.split(key, 5)

    x = jax.random.normal(kx, (B, T, n_embd), dtype=jnp.float32)

    # Deterministic param init (PyTorch Linear-like uniform bounds), stored
    # pre-transposed as [in, out].
    bound1 = 1.0 / math.sqrt(n_embd)
    w1 = jax.random.uniform(k1, (n_embd, hidden), jnp.float32, -bound1, bound1)
    b1 = jax.random.uniform(k2, (hidden,), jnp.float32, -bound1, bound1)
    bound2 = 1.0 / math.sqrt(hidden)
    w2 = jax.random.uniform(k3, (hidden, n_embd), jnp.float32, -bound2, bound2)
    b2 = jax.random.uniform(k4, (n_embd,), jnp.float32, -bound2, bound2)

    # Pad/cast weights once (hot path only touches activations).
    params = prepare_mlp_params(w1, b1, w2, b2)

    y = mlp_pallas(x, params)
    jax.block_until_ready(y)

    y_ref = mlp_reference(x, w1, b1, w2, b2)
    assert jnp.allclose(y, y_ref, atol=1e-5, rtol=1e-5), "mismatch vs reference"

    print("KERNEL_OK")
</pallas_src>

<mosaic_0001>
module attributes {stable_mosaic.version = 11 : i64} {
  func.func @mlp_kernel(%arg0: i32, %arg1: i32, %arg2: memref<256x128xf32, #tpu.memory_space<vmem>>, %arg3: memref<128x128xf32, #tpu.memory_space<vmem>>, %arg4: memref<1x128xf32, #tpu.memory_space<vmem>>, %arg5: memref<128x128xf32, #tpu.memory_space<vmem>>, %arg6: memref<1x128xf32, #tpu.memory_space<vmem>>, %arg7: memref<256x128xf32, #tpu.memory_space<vmem>>, %arg8: memref<256x128xf32, #tpu.memory_space<vmem>>) attributes {dimension_semantics = [#tpu.dimension_semantics<parallel>, #tpu.dimension_semantics<arbitrary>], iteration_bounds = array<i64: 2, 1>, scalar_prefetch = 0 : i64, scratch_operands = 1 : i64, tpu.core_type = #tpu.core_type<tc>, window_params = [{transform_indices = @transform_0, window_bounds = array<i64: 256, 128>}, {transform_indices = @transform_1, window_bounds = array<i64: 128, 128>}, {transform_indices = @transform_2, window_bounds = array<i64: 1, 128>}, {transform_indices = @transform_3, window_bounds = array<i64: 128, 128>}, {pipeline_mode = #tpu.pipeline_mode<synchronous>, transform_indices = @transform_4, window_bounds = array<i64: 1, 128>}, {transform_indices = @transform_5, window_bounds = array<i64: 256, 128>}]} {
    %c0_i32 = arith.constant 0 : i32
    %0 = arith.cmpi eq, %arg1, %c0_i32 : i32
    %1 = arith.extui %0 : i1 to i32
    %c0_i32_0 = arith.constant 0 : i32
    %2 = arith.cmpi ne, %1, %c0_i32_0 : i32
    scf.if %2 {
      %cst_19 = arith.constant 0.000000e+00 : f32
      %29 = vector.broadcast %cst_19 : f32 to vector<256x128xf32>
      %c0_20 = arith.constant 0 : index
      %c0_21 = arith.constant 0 : index
      %30 = vector.load %arg8[%c0_20, %c0_21] : memref<256x128xf32, #tpu.memory_space<vmem>>, vector<256x128xf32>
      tpu.vector_store %arg8[%c0_20, %c0_21], %29 {strides = array<i32>} : memref<256x128xf32, #tpu.memory_space<vmem>>, vector<256x128xf32>,
    } else {
    }
    %c0 = arith.constant 0 : index
    %c0_1 = arith.constant 0 : index
    %3 = vector.load %arg2[%c0, %c0_1] : memref<256x128xf32, #tpu.memory_space<vmem>>, vector<256x128xf32>
    %c0_2 = arith.constant 0 : index
    %c0_3 = arith.constant 0 : index
    %4 = vector.load %arg3[%c0_2, %c0_3] : memref<128x128xf32, #tpu.memory_space<vmem>>, vector<128x128xf32>
    %cst = arith.constant dense<0.000000e+00> : vector<256x128xf32>
    %5 = tpu.matmul %3, %4, %cst {dimension_numbers = #tpu.dot_dimension_numbers<[1], [0], [0], [1], [0, 0, 1, 1], [], []>} : vector<256x128xf32>, vector<128x128xf32>, vector<256x128xf32> -> vector<256x128xf32>
    %c0_4 = arith.constant 0 : index
    %c0_5 = arith.constant 0 : index
    %6 = vector.load %arg4[%c0_4, %c0_5] : memref<1x128xf32, #tpu.memory_space<vmem>>, vector<1x128xf32>
    %7 = vector.broadcast %6 : vector<1x128xf32> to vector<256x128xf32>
    %8 = arith.addf %5, %7 : vector<256x128xf32>
    %cst_6 = arith.constant 5.000000e-01 : f32
    %9 = vector.broadcast %cst_6 : f32 to vector<256x128xf32>
    %10 = arith.mulf %9, %8 : vector<256x128xf32>
    %cst_7 = arith.constant 0.0356774069 : f32
    %11 = vector.broadcast %cst_7 : f32 to vector<256x128xf32>
    %12 = arith.mulf %11, %8 : vector<256x128xf32>
    %13 = arith.mulf %12, %8 : vector<256x128xf32>
    %cst_8 = arith.constant 0.797884583 : f32
    %14 = vector.broadcast %cst_8 : f32 to vector<256x128xf32>
    %15 = arith.addf %14, %13 : vector<256x128xf32>
    %16 = arith.mulf %8, %15 : vector<256x128xf32>
    %17 = math.tanh %16 : vector<256x128xf32>
    %cst_9 = arith.constant 1.000000e+00 : f32
    %18 = vector.broadcast %cst_9 : f32 to vector<256x128xf32>
    %19 = arith.addf %18, %17 : vector<256x128xf32>
    %20 = arith.mulf %10, %19 : vector<256x128xf32>
    %c0_10 = arith.constant 0 : index
    %c0_11 = arith.constant 0 : index
    %21 = vector.load %arg8[%c0_10, %c0_11] : memref<256x128xf32, #tpu.memory_space<vmem>>, vector<256x128xf32>
    %c0_12 = arith.constant 0 : index
    %c0_13 = arith.constant 0 : index
    %22 = vector.load %arg5[%c0_12, %c0_13] : memref<128x128xf32, #tpu.memory_space<vmem>>, vector<128x128xf32>
    %cst_14 = arith.constant dense<0.000000e+00> : vector<256x128xf32>
    %23 = tpu.matmul %20, %22, %cst_14 {dimension_numbers = #tpu.dot_dimension_numbers<[1], [0], [0], [1], [0, 0, 1, 1], [], []>} : vector<256x128xf32>, vector<128x128xf32>, vector<256x128xf32> -> vector<256x128xf32>
    %24 = arith.addf %21, %23 : vector<256x128xf32>
    %c0_15 = arith.constant 0 : index
    %c0_16 = arith.constant 0 : index
    %25 = vector.load %arg8[%c0_15, %c0_16] : memref<256x128xf32, #tpu.memory_space<vmem>>, vector<256x128xf32>
    tpu.vector_store %arg8[%c0_15, %c0_16], %24 {strides = array<i32>} : memref<256x128xf32, #tpu.memory_space<vmem>>, vector<256x128xf32>,
    %c0_i32_17 = arith.constant 0 : i32
    %26 = arith.cmpi eq, %arg1, %c0_i32_17 : i32
    %27 = arith.extui %26 : i1 to i32
    %c0_i32_18 = arith.constant 0 : i32
    %28 = arith.cmpi ne, %27, %c0_i32_18 : i32
    scf.if %28 {
      %c0_19 = arith.constant 0 : index
      %c0_20 = arith.constant 0 : index
      %29 = vector.load %arg8[%c0_19, %c0_20] : memref<256x128xf32, #tpu.memory_space<vmem>>, vector<256x128xf32>
      %c0_21 = arith.constant 0 : index
      %c0_22 = arith.constant 0 : index
      %30 = vector.load %arg6[%c0_21, %c0_22] : memref<1x128xf32, #tpu.memory_space<vmem>>, vector<1x128xf32>
      %31 = vector.broadcast %30 : vector<1x128xf32> to vector<256x128xf32>
      %32 = arith.addf %29, %31 : vector<256x128xf32>
      %c0_23 = arith.constant 0 : index
      %c0_24 = arith.constant 0 : index
      %33 = vector.load %arg7[%c0_23, %c0_24] : memref<256x128xf32, #tpu.memory_space<vmem>>, vector<256x128xf32>
      tpu.vector_store %arg7[%c0_23, %c0_24], %32 {strides = array<i32>} : memref<256x128xf32, #tpu.memory_space<vmem>>, vector<256x128xf32>,
    } else {
    }
    return
  }
  func.func @transform_0(%arg0: i32, %arg1: i32) -> (i32, i32) {
    %c0_i32 = arith.constant 0 : i32
    %c0_i32_0 = arith.constant 0 : i32
    return %arg0, %c0_i32 : i32, i32
  }
  func.func @transform_1(%arg0: i32, %arg1: i32) -> (i32, i32) {
    %c0_i32 = arith.constant 0 : i32
    %c0_i32_0 = arith.constant 0 : i32
    return %c0_i32, %arg1 : i32, i32
  }
  func.func @transform_2(%arg0: i32, %arg1: i32) -> (i32, i32) {
    %c0_i32 = arith.constant 0 : i32
    %c0_i32_0 = arith.constant 0 : i32
    return %c0_i32, %arg1 : i32, i32
  }
  func.func @transform_3(%arg0: i32, %arg1: i32) -> (i32, i32) {
    %c0_i32 = arith.constant 0 : i32
    %c0_i32_0 = arith.constant 0 : i32
    return %arg1, %c0_i32 : i32, i32
  }
  func.func @transform_4(%arg0: i32, %arg1: i32) -> (i32, i32) {
    %c0_i32 = arith.constant 0 : i32
    %c0_i32_0 = arith.constant 0 : i32
    %c0_i32_1 = arith.constant 0 : i32
    return %c0_i32, %c0_i32_0 : i32, i32
  }
  func.func @transform_5(%arg0: i32, %arg1: i32) -> (i32, i32) {
    %c0_i32 = arith.constant 0 : i32
    %c0_i32_0 = arith.constant 0 : i32
    return %arg0, %c0_i32 : i32, i32
  }
}

</mosaic_0001>

<llo_original>
// kernel: tpu_custom_call.1
$region0: #{tpu_custom_call.1}
  #allocation0 [shape = 'u32[]', space=smem, size = 0x4, offset = 0x4, fixed_abs, tag = 'smem constant byte address 0x4 - core index']
  #allocation1 [shape = 'u32[144,128]{1,0:T(1,128)}', space=vmem, size = 0x12000, scoped, tag = 'internal scratch']
  #allocation2 [shape = 'f32[256,128]{1,0:T(8,128)}', space=vmem, size = 0x20000, scoped, tag = 'scratch operand']
  %s0 = inlined_call_operand.hbm [shape: f32[512,128], index: 0, kind: input, shape index: {}]
  %s1 = inlined_call_operand.hbm [shape: f32[128,128], index: 1, kind: input, shape index: {}]
  %s2 = inlined_call_operand.vmem [shape: f32[1,128], index: 2, kind: input, shape index: {}]
  %s3 = inlined_call_operand.hbm [shape: f32[128,128], index: 3, kind: input, shape index: {}]
  %s4 = inlined_call_operand.vmem [shape: f32[1,128], index: 4, kind: input, shape index: {}]
  %s5 = inlined_call_operand.hbm [shape: f32[512,128], index: 5, kind: output, shape index: {}]
  %s6 = sld [smem:[#allocation0]]
  $region73: #{tpu_custom_call.1} parent=0
    _
  %s8 = ssub.s32 1, %s6
  %s9 = scalar_select 0, %s8, %s6
  $region1: #{tpu_custom_call.1} parent=0
    #allocation3 [shape = 'u8[262144]{0}', space=vmem, size = 0x40000, scoped, tag = 'input window, operand 0']
    #allocation4 [shape = 's32[2]{0}', space=sflag, size = 0x8, scoped, tag = 'scoped memory for tpu_custom_call.1']
    #allocation5 [shape = 's32[2]{0}', space=sflag, size = 0x8, scoped, tag = 'scoped memory for tpu_custom_call.1']
    #allocation6 [shape = 'u8[65536]{0}', space=vmem, size = 0x10000, scoped, tag = 'input window, operand 1, single buffered']
    #allocation7 [shape = 's32[1]{0}', space=sflag, size = 0x4, scoped, tag = 'scoped memory for tpu_custom_call.1']
    #allocation8 [shape = 'u8[65536]{0}', space=vmem, size = 0x10000, scoped, tag = 'input window, operand 3, single buffered']
    #allocation9 [shape = 'u8[262144]{0}', space=vmem, size = 0x40000, scoped, tag = 'output window, operand 0']
    %10 = vsyncpa [#allocation4], 0
    %s11 = scalar_lea.sflag [#allocation4], 1
    %12 = vsyncpa %s11, 0
    %13 = vsyncpa [#allocation7], 0
    %14 = vsyncpa [#allocation5], 0
    %s15 = scalar_lea.sflag [#allocation5], 1
    %16 = vsyncpa %s15, 0
    loop: start=0, step=1, limit=4
    $region2: #{tpu_custom_call.1} parent=1 // loop_pre_header
      _
    $region3: #{tpu_custom_call.1} parent=1 // loop_header
      %s18 = sphi 0, %s22
      %p19 = scmp.ge.s32.totalorder %s18, 4
      %s25 = sphi 0, %s37
      %s26 = sphi 0, %s33
      %s27 = sphi 0, %s25
      %s28 = sphi 0, %s26
      %s29 = sphi 0, %s27
      %s30 = sphi 0, %s28
      %s40 = sphi 0, %s42
      %s43 = sphi 0, %s40
      %s44 = sphi 0, %s43
      %s60 = sphi 0, %s44
      %s66 = sphi 0, %s68
      %s69 = sphi 0, %s66
      %s70 = sphi 0, %s69
      %s86 = sphi 0, %s70
      %s92 = sphi 0, %s94
      %s95 = sphi 0, %s92
      %s96 = sphi 0, %s95
      %s112 = sphi 0, %s96
      %s118 = sphi 0, %s120
      %s121 = sphi 0, %s118
      %s122 = sphi 0, %s121
      %s138 = sphi 0, %s122
      %s142 = sphi 0, %s142
      %s144 = sphi 0, %s142
      %s145 = sphi 0, %s144
      %s159 = sphi 0, %s145
      %s165 = sphi 0, %s167
      %s168 = sphi 0, %s165
      %s169 = sphi 0, %s168
      %s185 = sphi 0, %s169
    $region4: #{tpu_custom_call.1} parent=1 // loop_header_branch
      %21 = sbr.rel (%p19) target = $region8
    $region5: #{tpu_custom_call.1} parent=1 // loop_body
      %s23 = ssub.s32 %s18, 1
      %s24 = ssub.s32 %s18, 2
      %s31 = sadd.s32 1, %s26
      %p32 = scmp.ge.s32.totalorder %s31, 1
      %s33 = scalar_select %p32, 0, %s31
      %s34 = sadd.s32 1, %s25
      %s35 = scalar_select %p32, %s34, %s25
      %p36 = scmp.ge.s32.totalorder %s35, 2
      %s37 = scalar_select %p36, 0, %s35
      %s38 = ssub.s32 %s25, %s37
      %p39 = scmp.eq.s32.totalorder %s38, 0
      %s41 = sadd.s32 %s40, 1
      %s42 = scalar_select %p39, %s40, %s41
      %p45 = pneg %p39
      %p46 = scmp.eq.s32.totalorder %s18, 1
      %p47 = por %p45, %p46
      %p48 = scmp.ne.s32.totalorder %s40, %s43
      %p49 = scmp.eq.s32.totalorder %s18, 0
      %p50 = por %p48, %p49
      %p51 = scmp.ne.s32.totalorder %s40, %s43
      %p52 = scmp.eq.s32.totalorder %s23, 1
      %p53 = por %p51, %p52
      %p54 = scmp.ne.s32.totalorder %s43, %s44
      %p55 = scmp.eq.s32.totalorder %s23, 0
      %p56 = por %p54, %p55
      %p57 = scmp.ne.s32.totalorder %s43, %s44
      %p58 = scmp.eq.s32.totalorder %s24, 1
      %p59 = por %p57, %p58
      %p61 = scmp.ne.s32.totalorder %s44, %s60
      %p62 = scmp.eq.s32.totalorder %s24, 0
      %p63 = por %p61, %p62
      %s64 = ssub.s32 %s26, %s33
      %p65 = scmp.eq.s32.totalorder %s64, 0
      %s67 = sadd.s32 %s66, 1
      %s68 = scalar_select %p65, %s66, %s67
      %p71 = pneg %p65
      %p72 = scmp.eq.s32.totalorder %s18, 1
      %p73 = por %p71, %p72
      %p74 = scmp.ne.s32.totalorder %s66, %s69
      %p75 = scmp.eq.s32.totalorder %s18, 0
      %p76 = por %p74, %p75
      %p77 = scmp.ne.s32.totalorder %s66, %s69
      %p78 = scmp.eq.s32.totalorder %s23, 1
      %p79 = por %p77, %p78
      %p80 = scmp.ne.s32.totalorder %s69, %s70
      %p81 = scmp.eq.s32.totalorder %s23, 0
      %p82 = por %p80, %p81
      %p83 = scmp.ne.s32.totalorder %s69, %s70
      %p84 = scmp.eq.s32.totalorder %s24, 1
      %p85 = por %p83, %p84
      %p87 = scmp.ne.s32.totalorder %s70, %s86
      %p88 = scmp.eq.s32.totalorder %s24, 0
      %p89 = por %p87, %p88
      %s90 = ssub.s32 %s26, %s33
      %p91 = scmp.eq.s32.totalorder %s90, 0
      %s93 = sadd.s32 %s92, 1
      %s94 = scalar_select %p91, %s92, %s93
      %p97 = pneg %p91
      %p98 = scmp.eq.s32.totalorder %s18, 1
      %p99 = por %p97, %p98
      %p100 = scmp.ne.s32.totalorder %s92, %s95
      %p101 = scmp.eq.s32.totalorder %s18, 0
      %p102 = por %p100, %p101
      %p103 = scmp.ne.s32.totalorder %s92, %s95
      %p104 = scmp.eq.s32.totalorder %s23, 1
      %p105 = por %p103, %p104
      %p106 = scmp.ne.s32.totalorder %s95, %s96
      %p107 = scmp.eq.s32.totalorder %s23, 0
      %p108 = por %p106, %p107
      %p109 = scmp.ne.s32.totalorder %s95, %s96
      %p110 = scmp.eq.s32.totalorder %s24, 1
      %p111 = por %p109, %p110
      %p113 = scmp.ne.s32.totalorder %s96, %s112
      %p114 = scmp.eq.s32.totalorder %s24, 0
      %p115 = por %p113, %p114
      %s116 = ssub.s32 %s26, %s33
      %p117 = scmp.eq.s32.totalorder %s116, 0
      %s119 = sadd.s32 %s118, 1
      %s120 = scalar_select %p117, %s118, %s119
      %p123 = pneg %p117
      %p124 = scmp.eq.s32.totalorder %s18, 1
      %p125 = por %p123, %p124
      %p126 = scmp.ne.s32.totalorder %s118, %s121
      %p127 = scmp.eq.s32.totalorder %s18, 0
      %p128 = por %p126, %p127
      %p129 = scmp.ne.s32.totalorder %s118, %s121
      %p130 = scmp.eq.s32.totalorder %s23, 1
      %p131 = por %p129, %p130
      %p132 = scmp.ne.s32.totalorder %s121, %s122
      %p133 = scmp.eq.s32.totalorder %s23, 0
      %p134 = por %p132, %p133
      %p135 = scmp.ne.s32.totalorder %s121, %s122
      %p136 = scmp.eq.s32.totalorder %s24, 1
      %p137 = por %p135, %p136
      %p139 = scmp.ne.s32.totalorder %s122, %s138
      %p140 = scmp.eq.s32.totalorder %s24, 0
      %p141 = por %p139, %p140
      %s143 = sadd.s32 %s142, 1
      %p146 = scmp.eq.s32.totalorder %s18, 1
      %p147 = scmp.ne.s32.totalorder %s142, %s144
      %p148 = scmp.eq.s32.totalorder %s18, 0
      %p149 = por %p147, %p148
      %p150 = scmp.ne.s32.totalorder %s142, %s144
      %p151 = scmp.eq.s32.totalorder %s23, 1
      %p152 = por %p150, %p151
      %p153 = scmp.ne.s32.totalorder %s144, %s145
      %p154 = scmp.eq.s32.totalorder %s23, 0
      %p155 = por %p153, %p154
      %p156 = scmp.ne.s32.totalorder %s144, %s145
      %p157 = scmp.eq.s32.totalorder %s24, 1
      %p158 = por %p156, %p157
      %p160 = scmp.ne.s32.totalorder %s145, %s159
      %p161 = scmp.eq.s32.totalorder %s24, 0
      %p162 = por %p160, %p161
      %s163 = ssub.s32 %s25, %s37
      %p164 = scmp.eq.s32.totalorder %s163, 0
      %s166 = sadd.s32 %s165, 1
      %s167 = scalar_select %p164, %s165, %s166
      %p170 = pneg %p164
      %p171 = scmp.eq.s32.totalorder %s18, 1
      %p172 = por %p170, %p171
      %p173 = scmp.ne.s32.totalorder %s165, %s168
      %p174 = scmp.eq.s32.totalorder %s18, 0
      %p175 = por %p173, %p174
      %p176 = scmp.ne.s32.totalorder %s165, %s168
      %p177 = scmp.eq.s32.totalorder %s23, 1
      %p178 = por %p176, %p177
      %p179 = scmp.ne.s32.totalorder %s168, %s169
      %p180 = scmp.eq.s32.totalorder %s23, 0
      %p181 = por %p179, %p180
      %p182 = scmp.ne.s32.totalorder %s168, %s169
      %p183 = scmp.eq.s32.totalorder %s24, 1
      %p184 = por %p182, %p183
      %p186 = scmp.ne.s32.totalorder %s169, %s185
      %p187 = scmp.eq.s32.totalorder %s24, 0
      %p188 = por %p186, %p187
      %p189 = scmp.le.s32.totalorder 1, %s18
      %p190 = scmp.lt.s32.totalorder %s18, 3
      %p191 = pnand %p189, %p190
      %p192 = pneg %p191
      // Predicated region
      $region9: #{tpu_custom_call.1} parent=5 // pred_check
        _
      $region10: #{tpu_custom_call.1} parent=5 // pred_check_branch
        %194 = sbr.rel (%p191) target = $region12
      $region11: #{tpu_custom_call.1} parent=5 // pred_region
        %s195 = ssub.s32 %s18, 1
        // Predicated region
        $region13: #{tpu_custom_call.1} parent=11 // pred_check
          %p196 = pneg %p82
        $region14: #{tpu_custom_call.1} parent=11 // pred_check_branch
          %198 = sbr.rel (%p196) target = $region16
        $region15: #{tpu_custom_call.1} parent=11 // pred_region
          %s200 = ssub.s32 2048, 2048
          %201 = vsyncadd [#allocation7], %s200
          %s202 = smul.addr %s28, 128
          %s203 = scalar_lea.hbm %s1, %s202
          %s204 = sshll.u32 [#allocation6], 4
          %s205 = int_to_ptr.vmem [resolvable:$true] %s204
          %210 = dma.hbm_to_vmem [thread:$0]  %s203, 2048, %s205, [#allocation7], 128, 128, 8
        $region16: #{tpu_custom_call.1} parent=11 // pred_fallthru
          _
        // Predicated region
        $region17: #{tpu_custom_call.1} parent=11 // pred_check
          %p211 = pneg %p108
        $region18: #{tpu_custom_call.1} parent=11 // pred_check_branch
          %213 = sbr.rel (%p211) target = $region20
        $region19: #{tpu_custom_call.1} parent=11 // pred_region
          %p214 = scmp.lt.s32.totalorder %s28, 0
          %s215 = scalar_select %p214, %s28, 0
          %s216 = scalar_lea.vmem %s2, %s215
        $region20: #{tpu_custom_call.1} parent=11 // pred_fallthru
          _
        // Predicated region
        $region21: #{tpu_custom_call.1} parent=11 // pred_check
          %p217 = pneg %p134
        $region22: #{tpu_custom_call.1} parent=11 // pred_check_branch
          %219 = sbr.rel (%p217) target = $region24
        $region23: #{tpu_custom_call.1} parent=11 // pred_region
          %s220 = smul.u32 16, %s28
          %s222 = ssub.s32 2048, 2048
          %223 = vsyncadd [#allocation7], %s222
          %s224 = smul.addr %s220, 128
          %s225 = scalar_lea.hbm %s3, %s224
          %s226 = sshll.u32 [#allocation8], 4
          %s227 = int_to_ptr.vmem [resolvable:$true] %s226
          %232 = dma.hbm_to_vmem [thread:$0]  %s225, 2048, %s227, [#allocation7], 128, 128, 8
        $region24: #{tpu_custom_call.1} parent=11 // pred_fallthru
          _
        // Predicated region
        $region25: #{tpu_custom_call.1} parent=11 // pred_check
          %p233 = pneg %p155
        $region26: #{tpu_custom_call.1} parent=11 // pred_check_branch
          %235 = sbr.rel (%p233) target = $region28
        $region27: #{tpu_custom_call.1} parent=11 // pred_region
          _
        $region28: #{tpu_custom_call.1} parent=11 // pred_fallthru
          _
      $region12: #{tpu_custom_call.1} parent=5 // pred_fallthru
        _
      %p236 = scmp.lt.s32.totalorder %s18, 2
      // Predicated region
      $region29: #{tpu_custom_call.1} parent=5 // pred_check
        %p237 = pneg %p236
      $region30: #{tpu_custom_call.1} parent=5 // pred_check_branch
        %239 = sbr.rel (%p237) target = $region32
      $region31: #{tpu_custom_call.1} parent=5 // pred_region
        // Predicated region
        $region33: #{tpu_custom_call.1} parent=31 // pred_check
          %p240 = pneg %p50
        $region34: #{tpu_custom_call.1} parent=31 // pred_check_branch
          %242 = sbr.rel (%p240) target = $region36
        $region35: #{tpu_custom_call.1} parent=31 // pred_region
          %s243 = sand.u32 %s40, 1
          %s244 = scalar_lea.sflag [#allocation4], %s243
          %s245 = sand.u32 %s40, 1
          %s246 = smul.addr %s245, 256
          %s247 = scalar_lea.vmem [#allocation3], %s246
          %s248 = smul.u32 32, %s25
          %s250 = ssub.s32 4096, 4096
          %251 = vsyncadd %s244, %s250
          %s252 = smul.addr %s248, 128
          %s253 = scalar_lea.hbm %s0, %s252
          %s254 = sshll.u32 %s247, 4
          %s255 = int_to_ptr.vmem [resolvable:$true] %s254
          %260 = dma.hbm_to_vmem [thread:$0]  %s253, 4096, %s255, %s244, 128, 128, 8
        $region36: #{tpu_custom_call.1} parent=31 // pred_fallthru
          _
      $region32: #{tpu_custom_call.1} parent=5 // pred_fallthru
        _
      %p261 = scmp.le.s32.totalorder 1, %s18
      %p262 = scmp.lt.s32.totalorder %s18, 3
      %p263 = pnand %p261, %p262
      %p264 = pneg %p263
      // Predicated region
      $region37: #{tpu_custom_call.1} parent=5 // pred_check
        _
      $region38: #{tpu_custom_call.1} parent=5 // pred_check_branch
        %266 = sbr.rel (%p263) target = $region40
      $region39: #{tpu_custom_call.1} parent=5 // pred_region
        %s267 = ssub.s32 %s18, 1
        %s268 = sand.u32 %s43, 1
        %s269 = scalar_lea.sflag [#allocation4], %s268
        %s270 = sand.u32 %s43, 1
        %s271 = smul.addr %s270, 256
        %s272 = scalar_lea.vmem [#allocation3], %s271
        // Predicated region
        $region41: #{tpu_custom_call.1} parent=39 // pred_check
          %p273 = pneg %p56
        $region42: #{tpu_custom_call.1} parent=39 // pred_check_branch
          %275 = sbr.rel (%p273) target = $region44
        $region43: #{tpu_custom_call.1} parent=39 // pred_region
          %276 = dma.done %s269, 4096
        $region44: #{tpu_custom_call.1} parent=39 // pred_fallthru
          _
        // Predicated region
        $region45: #{tpu_custom_call.1} parent=39 // pred_check
          %p277 = pneg %p82
        $region46: #{tpu_custom_call.1} parent=39 // pred_check_branch
          %279 = sbr.rel (%p277) target = $region48
        $region47: #{tpu_custom_call.1} parent=39 // pred_region
          %280 = dma.done [#allocation7], 2048
        $region48: #{tpu_custom_call.1} parent=39 // pred_fallthru
          _
        // Predicated region
        $region49: #{tpu_custom_call.1} parent=39 // pred_check
          %p281 = pneg %p134
        $region50: #{tpu_custom_call.1} parent=39 // pred_check_branch
          %283 = sbr.rel (%p281) target = $region52
        $region51: #{tpu_custom_call.1} parent=39 // pred_region
          %284 = dma.done [#allocation7], 2048
        $region52: #{tpu_custom_call.1} parent=39 // pred_fallthru
          _
        %s285 = sand.u32 %s43, 1
        %s286 = scalar_lea.sflag [#allocation4], %s285
        %s287 = sand.u32 %s43, 1
        %s288 = smul.addr %s287, 256
        %s289 = scalar_lea.vmem [#allocation3], %s288
        %p290 = pneg %p56
        %p291 = pneg %p53
        %p292 = pneg %p82
        %p293 = pneg %p79
        %p294 = scmp.lt.s32.totalorder %s28, 0
        %s295 = scalar_select %p294, %s28, 0
        %s296 = scalar_lea.vmem %s2, %s295
        %p297 = pneg %p108
        %p298 = pneg %p105
        %p299 = pneg %p134
        %p300 = pneg %p131
        %p301 = pneg %p155
        %p302 = pneg %p152
        %p303 = pneg %p181
        %p304 = pneg %p178
        %s305 = sand.u32 %s168, 1
        %s306 = scalar_lea.sflag [#allocation5], %s305
        %s307 = sand.u32 %s168, 1
        %s308 = smul.addr %s307, 256
        %s309 = scalar_lea.vmem [#allocation9], %s308
        %s310 = smul.u32 32, %s27
        %p311 = scmp.lt.s32.totalorder %s28, 0
        %s312 = scalar_select %p311, %s28, 0
        %s313 = scalar_lea.vmem %s2, %s312
        %s314 = smul.u32 16, %s28
        %s315 = smul.u32 32, %s27
        %p316 = scmp.eq.s32.totalorder %s28, 0
        // Predicated region
        $region53: #{tpu_custom_call.1} parent=39 // pred_check
          %p317 = pneg %p316
        $region54: #{tpu_custom_call.1} parent=39 // pred_check_branch
          %319 = sbr.rel (%p317) target = $region56
        $region55: #{tpu_custom_call.1} parent=39 // pred_region
          %320 = vst [vmem:[#allocation2] sm:$0xff] 0.0
          %321 = vst [vmem:[#allocation2 + $0x8] sm:$0xff] 0.0
          %322 = vst [vmem:[#allocation2 + $0x10] sm:$0xff] 0.0
          %323 = vst [vmem:[#allocation2 + $0x18] sm:$0xff] 0.0
          %324 = vst [vmem:[#allocation2 + $0x20] sm:$0xff] 0.0
          %325 = vst [vmem:[#allocation2 + $0x28] sm:$0xff] 0.0
          %326 = vst [vmem:[#allocation2 + $0x30] sm:$0xff] 0.0
          %327 = vst [vmem:[#allocation2 + $0x38] sm:$0xff] 0.0
          %328 = vst [vmem:[#allocation2 + $0x40] sm:$0xff] 0.0
          %329 = vst [vmem:[#allocation2 + $0x48] sm:$0xff] 0.0
          %330 = vst [vmem:[#allocation2 + $0x50] sm:$0xff] 0.0
          %331 = vst [vmem:[#allocation2 + $0x58] sm:$0xff] 0.0
          %332 = vst [vmem:[#allocation2 + $0x60] sm:$0xff] 0.0
          %333 = vst [vmem:[#allocation2 + $0x68] sm:$0xff] 0.0
          %334 = vst [vmem:[#allocation2 + $0x70] sm:$0xff] 0.0
          %335 = vst [vmem:[#allocation2 + $0x78] sm:$0xff] 0.0
          %336 = vst [vmem:[#allocation2 + $0x80] sm:$0xff] 0.0
          %337 = vst [vmem:[#allocation2 + $0x88] sm:$0xff] 0.0
          %338 = vst [vmem:[#allocation2 + $0x90] sm:$0xff] 0.0
          %339 = vst [vmem:[#allocation2 + $0x98] sm:$0xff] 0.0
          %340 = vst [vmem:[#allocation2 + $0xa0] sm:$0xff] 0.0
          %341 = vst [vmem:[#allocation2 + $0xa8] sm:$0xff] 0.0
          %342 = vst [vmem:[#allocation2 + $0xb0] sm:$0xff] 0.0
          %343 = vst [vmem:[#allocation2 + $0xb8] sm:$0xff] 0.0
          %344 = vst [vmem:[#allocation2 + $0xc0] sm:$0xff] 0.0
          %345 = vst [vmem:[#allocation2 + $0xc8] sm:$0xff] 0.0
          %346 = vst [vmem:[#allocation2 + $0xd0] sm:$0xff] 0.0
          %347 = vst [vmem:[#allocation2 + $0xd8] sm:$0xff] 0.0
          %348 = vst [vmem:[#allocation2 + $0xe0] sm:$0xff] 0.0
          %349 = vst [vmem:[#allocation2 + $0xe8] sm:$0xff] 0.0
          %350 = vst [vmem:[#allocation2 + $0xf0] sm:$0xff] 0.0
          %351 = vst [vmem:[#allocation2 + $0xf8] sm:$0xff] 0.0
        $region56: #{tpu_custom_call.1} parent=39 // pred_fallthru
          _
        %v352 = vld [vmem:[%s272] sm:$0xff]
        %v353 = vld [vmem:[%s272 + $0x8] sm:$0xff]
        %v354 = vld [vmem:[%s272 + $0x10] sm:$0xff]
        %v355 = vld [vmem:[%s272 + $0x18] sm:$0xff]
        %v356 = vld [vmem:[%s272 + $0x20] sm:$0xff]
        %v357 = vld [vmem:[%s272 + $0x28] sm:$0xff]
        %v358 = vld [vmem:[%s272 + $0x30] sm:$0xff]
        %v359 = vld [vmem:[%s272 + $0x38] sm:$0xff]
        %v360 = vld [vmem:[%s272 + $0x40] sm:$0xff]
        %v361 = vld [vmem:[%s272 + $0x48] sm:$0xff]
        %v362 = vld [vmem:[%s272 + $0x50] sm:$0xff]
        %v363 = vld [vmem:[%s272 + $0x58] sm:$0xff]
        %v364 = vld [vmem:[%s272 + $0x60] sm:$0xff]
        %v365 = vld [vmem:[%s272 + $0x68] sm:$0xff]
        %v366 = vld [vmem:[%s272 + $0x70] sm:$0xff]
        %v367 = vld [vmem:[%s272 + $0x78] sm:$0xff]
        %v368 = vld [vmem:[%s272 + $0x80] sm:$0xff]
        %v369 = vld [vmem:[%s272 + $0x88] sm:$0xff]
        %v370 = vld [vmem:[%s272 + $0x90] sm:$0xff]
        %v371 = vld [vmem:[%s272 + $0x98] sm:$0xff]
        %v372 = vld [vmem:[%s272 + $0xa0] sm:$0xff]
        %v373 = vld [vmem:[%s272 + $0xa8] sm:$0xff]
        %v374 = vld [vmem:[%s272 + $0xb0] sm:$0xff]
        %v375 = vld [vmem:[%s272 + $0xb8] sm:$0xff]
        %v376 = vld [vmem:[%s272 + $0xc0] sm:$0xff]
        %v377 = vld [vmem:[%s272 + $0xc8] sm:$0xff]
        %v378 = vld [vmem:[%s272 + $0xd0] sm:$0xff]
        %v379 = vld [vmem:[%s272 + $0xd8] sm:$0xff]
        %v380 = vld [vmem:[%s272 + $0xe0] sm:$0xff]
        %v381 = vld [vmem:[%s272 + $0xe8] sm:$0xff]
        %v382 = vld [vmem:[%s272 + $0xf0] sm:$0xff]
        %v383 = vld [vmem:[%s272 + $0xf8] sm:$0xff]
        %v384 = vld [vmem:[#allocation6] sm:$0xff]
        %v385 = vld [vmem:[#allocation6 + $0x8] sm:$0xff]
        %v386 = vld [vmem:[#allocation6 + $0x10] sm:$0xff]
        %v387 = vld [vmem:[#allocation6 + $0x18] sm:$0xff]
        %v388 = vld [vmem:[#allocation6 + $0x20] sm:$0xff]
        %v389 = vld [vmem:[#allocation6 + $0x28] sm:$0xff]
        %v390 = vld [vmem:[#allocation6 + $0x30] sm:$0xff]
        %v391 = vld [vmem:[#allocation6 + $0x38] sm:$0xff]
        %v392 = vld [vmem:[#allocation6 + $0x40] sm:$0xff]
        %v393 = vld [vmem:[#allocation6 + $0x48] sm:$0xff]
        %v394 = vld [vmem:[#allocation6 + $0x50] sm:$0xff]
        %v395 = vld [vmem:[#allocation6 + $0x58] sm:$0xff]
        %v396 = vld [vmem:[#allocation6 + $0x60] sm:$0xff]
        %v397 = vld [vmem:[#allocation6 + $0x68] sm:$0xff]
        %v398 = vld [vmem:[#allocation6 + $0x70] sm:$0xff]
        %v399 = vld [vmem:[#allocation6 + $0x78] sm:$0xff]
        %v400 = vld [vmem:[%s313] sm:$0x1]
        %v402 = vlaneseq
        %v403 = vshrl.u32 %v402, 7
        %v404 = vsub.s32 0, %v403
        %v405 = vrot.slane %v400, %v404
        %407 = vmatprep.subr.mxu0 0.0
        %408 = vmatpush1.msra.mxu0 %v384
        %409 = vmatprep.subr.mxu0 0.0
        %410 = vmatpush1.msra.mxu0 %v385
        %411 = vmatprep.subr.mxu0 0.0
        %412 = vmatpush1.msra.mxu0 %v386
        %413 = vmatprep.subr.mxu0 0.0
        %414 = vmatpush1.msra.mxu0 %v387
        %415 = vmatprep.subr.mxu0 0.0
        %416 = vmatpush1.msra.mxu0 %v388
        %417 = vmatprep.subr.mxu0 0.0
        %418 = vmatpush1.msra.mxu0 %v389
        %419 = vmatprep.subr.mxu0 0.0
        %420 = vmatpush1.msra.mxu0 %v390
        %421 = vmatprep.subr.mxu0 0.0
        %422 = vmatpush1.msra.mxu0 %v391
        %423 = vmatprep.subr.mxu0 0.0
        %424 = vmatpush1.msra.mxu0 %v392
        %425 = vmatprep.subr.mxu0 0.0
        %426 = vmatpush1.msra.mxu0 %v393
        %427 = vmatprep.subr.mxu0 0.0
        %428 = vmatpush1.msra.mxu0 %v394
        %429 = vmatprep.subr.mxu0 0.0
        %430 = vmatpush1.msra.mxu0 %v395
        %431 = vmatprep.subr.mxu0 0.0
        %432 = vmatpush1.msra.mxu0 %v396
        %433 = vmatprep.subr.mxu0 0.0
        %434 = vmatpush1.msra.mxu0 %v397
        %435 = vmatprep.subr.mxu0 0.0
        %436 = vmatpush1.msra.mxu0 %v398
        %437 = vmatprep.subr.mxu0 0.0
        %438 = vmatpush1.msra.mxu0 %v399
        %439 = vmatprep.subr.mxu0 0.0
        %440 = vmatpush1.msra.mxu0 0.0
        %441 = vmatprep.subr.mxu0 0.0
        %442 = vmatpush1.msra.mxu0 0.0
        %443 = vmatprep.subr.mxu0 0.0
        %444 = vmatpush1.msra.mxu0 0.0
        %445 = vmatprep.subr.mxu0 0.0
        %446 = vmatpush1.msra.mxu0 0.0
        %447 = vmatprep.subr.mxu0 0.0
        %448 = vmatpush1.msra.mxu0 0.0
        %449 = vmatprep.subr.mxu0 0.0
        %450 = vmatpush1.msra.mxu0 0.0
        %451 = vmatprep.subr.mxu0 0.0
        %452 = vmatpush1.msra.mxu0 0.0
        %453 = vmatprep.subr.mxu0 0.0
        %454 = vmatpush1.msra.mxu0 0.0
        %455 = vmatprep.subr.mxu0 0.0
        %456 = vmatpush1.msra.mxu0 0.0
        %457 = vmatprep.subr.mxu0 0.0
        %458 = vmatpush1.msra.mxu0 0.0
        %459 = vmatprep.subr.mxu0 0.0
        %460 = vmatpush1.msra.mxu0 0.0
        %461 = vmatprep.subr.mxu0 0.0
        %462 = vmatpush1.msra.mxu0 0.0
        %463 = vmatprep.subr.mxu0 0.0
        %464 = vmatpush1.msra.mxu0 0.0
        %465 = vmatprep.subr.mxu0 0.0
        %466 = vmatpush1.msra.mxu0 0.0
        %467 = vmatprep.subr.mxu0 0.0
        %468 = vmatpush1.msra.mxu0 0.0
        %469 = vmatprep.subr.mxu0 0.0
        %470 = vmatpush1.msra.mxu0 0.0
        %471 = vmatprep.mubr.f32.mxu0 0.0
        %472 = vmatmul.mubr.f32.gmra.mrb[0].mxu0 %v352
        %v473 = vpop.f32.mrb[0].mxu0
        %v474 = vadd.f32 %v405, %v473
        %v475 = vpop.f32.mrb[0].mxu0
        %476 = vmatprep.mubr.f32.mxu0 0.0
        %477 = vmatmul.mubr.f32.gmra.mrb[0].mxu0 %v353
        %v478 = vpop.f32.mrb[0].mxu0
        %v479 = vadd.f32 %v405, %v478
        %v480 = vpop.f32.mrb[0].mxu0
        %481 = vmatprep.mubr.f32.mxu0 0.0
        %482 = vmatmul.mubr.f32.gmra.mrb[0].mxu0 %v354
        %v483 = vpop.f32.mrb[0].mxu0
        %v484 = vadd.f32 %v405, %v483
        %v485 = vpop.f32.mrb[0].mxu0
        %486 = vmatprep.mubr.f32.mxu0 0.0
        %487 = vmatmul.mubr.f32.gmra.mrb[0].mxu0 %v355
        %v488 = vpop.f32.mrb[0].mxu0
        %v489 = vadd.f32 %v405, %v488
        %v490 = vpop.f32.mrb[0].mxu0
        %491 = vmatprep.mubr.f32.mxu0 0.0
        %492 = vmatmul.mubr.f32.gmra.mrb[0].mxu0 %v356
        %v493 = vpop.f32.mrb[0].mxu0
        %v494 = vadd.f32 %v405, %v493
        %v495 = vpop.f32.mrb[0].mxu0
        %496 = vmatprep.mubr.f32.mxu0 0.0
        %497 = vmatmul.mubr.f32.gmra.mrb[0].mxu0 %v357
        %v498 = vpop.f32.mrb[0].mxu0
        %v499 = vadd.f32 %v405, %v498
        %v500 = vpop.f32.mrb[0].mxu0
        %501 = vmatprep.mubr.f32.mxu0 0.0
        %502 = vmatmul.mubr.f32.gmra.mrb[0].mxu0 %v358
        %v503 = vpop.f32.mrb[0].mxu0
        %v504 = vadd.f32 %v405, %v503
        %v505 = vpop.f32.mrb[0].mxu0
        %506 = vmatprep.mubr.f32.mxu0 0.0
        %507 = vmatmul.mubr.f32.gmra.mrb[0].mxu0 %v359
        %v508 = vpop.f32.mrb[0].mxu0
        %v509 = vadd.f32 %v405, %v508
        %v510 = vpop.f32.mrb[0].mxu0
        %511 = vmatprep.mubr.f32.mxu0 0.0
        %512 = vmatmul.mubr.f32.gmra.mrb[0].mxu0 %v360
        %v513 = vpop.f32.mrb[0].mxu0
        %v514 = vadd.f32 %v405, %v513
        %v515 = vpop.f32.mrb[0].mxu0
        %516 = vmatprep.mubr.f32.mxu0 0.0
        %517 = vmatmul.mubr.f32.gmra.mrb[0].mxu0 %v361
        %v518 = vpop.f32.mrb[0].mxu0
        %v519 = vadd.f32 %v405, %v518
        %v520 = vpop.f32.mrb[0].mxu0
        %521 = vmatprep.mubr.f32.mxu0 0.0
        %522 = vmatmul.mubr.f32.gmra.mrb[0].mxu0 %v362
        %v523 = vpop.f32.mrb[0].mxu0
        %v524 = vadd.f32 %v405, %v523
        %v525 = vpop.f32.mrb[0].mxu0
        %526 = vmatprep.mubr.f32.mxu0 0.0
        %527 = vmatmul.mubr.f32.gmra.mrb[0].mxu0 %v363
        %v528 = vpop.f32.mrb[0].mxu0
        %v529 = vadd.f32 %v405, %v528
        %v530 = vpop.f32.mrb[0].mxu0
        %531 = vmatprep.mubr.f32.mxu0 0.0
        %532 = vmatmul.mubr.f32.gmra.mrb[0].mxu0 %v364
        %v533 = vpop.f32.mrb[0].mxu0
        %v534 = vadd.f32 %v405, %v533
        %v535 = vpop.f32.mrb[0].mxu0
        %536 = vmatprep.mubr.f32.mxu0 0.0
        %537 = vmatmul.mubr.f32.gmra.mrb[0].mxu0 %v365
        %v538 = vpop.f32.mrb[0].mxu0
        %v539 = vadd.f32 %v405, %v538
        %v540 = vpop.f32.mrb[0].mxu0
        %541 = vmatprep.mubr.f32.mxu0 0.0
        %542 = vmatmul.mubr.f32.gmra.mrb[0].mxu0 %v366
        %v543 = vpop.f32.mrb[0].mxu0
        %v544 = vadd.f32 %v405, %v543
        %v545 = vpop.f32.mrb[0].mxu0
        %546 = vmatprep.mubr.f32.mxu0 0.0
        %547 = vmatmul.mubr.f32.gmra.mrb[0].mxu0 %v367
        %v548 = vpop.f32.mrb[0].mxu0
        %v549 = vadd.f32 %v405, %v548
        %v550 = vpop.f32.mrb[0].mxu0
        %551 = vmatprep.mubr.f32.mxu0 0.0
        %552 = vmatmul.mubr.f32.gmra.mrb[0].mxu0 %v368
        %v553 = vpop.f32.mrb[0].mxu0
        %v554 = vadd.f32 %v405, %v553
        %v555 = vpop.f32.mrb[0].mxu0
        %556 = vmatprep.mubr.f32.mxu0 0.0
        %557 = vmatmul.mubr.f32.gmra.mrb[0].mxu0 %v369
        %v558 = vpop.f32.mrb[0].mxu0
        %v559 = vadd.f32 %v405, %v558
        %v560 = vpop.f32.mrb[0].mxu0
        %561 = vmatprep.mubr.f32.mxu0 0.0
        %562 = vmatmul.mubr.f32.gmra.mrb[0].mxu0 %v370
        %v563 = vpop.f32.mrb[0].mxu0
        %v564 = vadd.f32 %v405, %v563
        %v565 = vpop.f32.mrb[0].mxu0
        %566 = vmatprep.mubr.f32.mxu0 0.0
        %567 = vmatmul.mubr.f32.gmra.mrb[0].mxu0 %v371
        %v568 = vpop.f32.mrb[0].mxu0
        %v569 = vadd.f32 %v405, %v568
        %v570 = vpop.f32.mrb[0].mxu0
        %571 = vmatprep.mubr.f32.mxu0 0.0
        %572 = vmatmul.mubr.f32.gmra.mrb[0].mxu0 %v372
        %v573 = vpop.f32.mrb[0].mxu0
        %v574 = vadd.f32 %v405, %v573
        %v575 = vpop.f32.mrb[0].mxu0
        %576 = vmatprep.mubr.f32.mxu0 0.0
        %577 = vmatmul.mubr.f32.gmra.mrb[0].mxu0 %v373
        %v578 = vpop.f32.mrb[0].mxu0
        %v579 = vadd.f32 %v405, %v578
        %v580 = vpop.f32.mrb[0].mxu0
        %581 = vmatprep.mubr.f32.mxu0 0.0
        %582 = vmatmul.mubr.f32.gmra.mrb[0].mxu0 %v374
        %v583 = vpop.f32.mrb[0].mxu0
        %v584 = vadd.f32 %v405, %v583
        %v585 = vpop.f32.mrb[0].mxu0
        %586 = vmatprep.mubr.f32.mxu0 0.0
        %587 = vmatmul.mubr.f32.gmra.mrb[0].mxu0 %v375
        %v588 = vpop.f32.mrb[0].mxu0
        %v589 = vadd.f32 %v405, %v588
        %v590 = vpop.f32.mrb[0].mxu0
        %591 = vmatprep.mubr.f32.mxu0 0.0
        %592 = vmatmul.mubr.f32.gmra.mrb[0].mxu0 %v376
        %v593 = vpop.f32.mrb[0].mxu0
        %v594 = vadd.f32 %v405, %v593
        %v595 = vpop.f32.mrb[0].mxu0
        %596 = vmatprep.mubr.f32.mxu0 0.0
        %597 = vmatmul.mubr.f32.gmra.mrb[0].mxu0 %v377
        %v598 = vpop.f32.mrb[0].mxu0
        %v599 = vadd.f32 %v405, %v598
        %v600 = vpop.f32.mrb[0].mxu0
        %601 = vmatprep.mubr.f32.mxu0 0.0
        %602 = vmatmul.mubr.f32.gmra.mrb[0].mxu0 %v378
        %v603 = vpop.f32.mrb[0].mxu0
        %v604 = vadd.f32 %v405, %v603
        %v605 = vpop.f32.mrb[0].mxu0
        %606 = vmatprep.mubr.f32.mxu0 0.0
        %607 = vmatmul.mubr.f32.gmra.mrb[0].mxu0 %v379
        %v608 = vpop.f32.mrb[0].mxu0
        %v609 = vadd.f32 %v405, %v608
        %v610 = vpop.f32.mrb[0].mxu0
        %611 = vmatprep.mubr.f32.mxu0 0.0
        %612 = vmatmul.mubr.f32.gmra.mrb[0].mxu0 %v380
        %v613 = vpop.f32.mrb[0].mxu0
        %v614 = vadd.f32 %v405, %v613
        %v615 = vpop.f32.mrb[0].mxu0
        %616 = vmatprep.mubr.f32.mxu0 0.0
        %617 = vmatmul.mubr.f32.gmra.mrb[0].mxu0 %v381
        %v618 = vpop.f32.mrb[0].mxu0
        %v619 = vadd.f32 %v405, %v618
        %v620 = vpop.f32.mrb[0].mxu0
        %621 = vmatprep.mubr.f32.mxu0 0.0
        %622 = vmatmul.mubr.f32.gmra.mrb[0].mxu0 %v382
        %v623 = vpop.f32.mrb[0].mxu0
        %v624 = vadd.f32 %v405, %v623
        %v625 = vpop.f32.mrb[0].mxu0
        %626 = vmatprep.mubr.f32.mxu0 0.0
        %627 = vmatmul.mubr.f32.gmra.mrb[0].mxu0 %v383
        %v628 = vpop.f32.mrb[0].mxu0
        %v629 = vadd.f32 %v405, %v628
        %v630 = vpop.f32.mrb[0].mxu0
        %631 = vdwg.mxu0
        %v632 = vmul.f32 %v474, 0.5
        %v633 = vmul.f32 %v479, 0.5
        %v634 = vmul.f32 %v484, 0.5
        %v635 = vmul.f32 %v489, 0.5
        %v636 = vmul.f32 %v494, 0.5
        %v637 = vmul.f32 %v499, 0.5
        %v638 = vmul.f32 %v504, 0.5
        %v639 = vmul.f32 %v509, 0.5
        %v640 = vmul.f32 %v514, 0.5
        %v641 = vmul.f32 %v519, 0.5
        %v642 = vmul.f32 %v524, 0.5
        %v643 = vmul.f32 %v529, 0.5
        %v644 = vmul.f32 %v534, 0.5
        %v645 = vmul.f32 %v539, 0.5
        %v646 = vmul.f32 %v544, 0.5
        %v647 = vmul.f32 %v549, 0.5
        %v648 = vmul.f32 %v554, 0.5
        %v649 = vmul.f32 %v559, 0.5
        %v650 = vmul.f32 %v564, 0.5
        %v651 = vmul.f32 %v569, 0.5
        %v652 = vmul.f32 %v574, 0.5
        %v653 = vmul.f32 %v579, 0.5
        %v654 = vmul.f32 %v584, 0.5
        %v655 = vmul.f32 %v589, 0.5
        %v656 = vmul.f32 %v594, 0.5
        %v657 = vmul.f32 %v599, 0.5
        %v658 = vmul.f32 %v604, 0.5
        %v659 = vmul.f32 %v609, 0.5
        %v660 = vmul.f32 %v614, 0.5
        %v661 = vmul.f32 %v619, 0.5
        %v662 = vmul.f32 %v624, 0.5
        %v663 = vmul.f32 %v629, 0.5
        %v664 = vmul.f32 %v474, 0.035677407
        %v665 = vmul.f32 %v479, 0.035677407
        %v666 = vmul.f32 %v484, 0.035677407
        %v667 = vmul.f32 %v489, 0.035677407
        %v668 = vmul.f32 %v494, 0.035677407
        %v669 = vmul.f32 %v499, 0.035677407
        %v670 = vmul.f32 %v504, 0.035677407
        %v671 = vmul.f32 %v509, 0.035677407
        %v672 = vmul.f32 %v514, 0.035677407
        %v673 = vmul.f32 %v519, 0.035677407
        %v674 = vmul.f32 %v524, 0.035677407
        %v675 = vmul.f32 %v529, 0.035677407
        %v676 = vmul.f32 %v534, 0.035677407
        %v677 = vmul.f32 %v539, 0.035677407
        %v678 = vmul.f32 %v544, 0.035677407
        %v679 = vmul.f32 %v549, 0.035677407
        %v680 = vmul.f32 %v554, 0.035677407
        %v681 = vmul.f32 %v559, 0.035677407
        %v682 = vmul.f32 %v564, 0.035677407
        %v683 = vmul.f32 %v569, 0.035677407
        %v684 = vmul.f32 %v574, 0.035677407
        %v685 = vmul.f32 %v579, 0.035677407
        %v686 = vmul.f32 %v584, 0.035677407
        %v687 = vmul.f32 %v589, 0.035677407
        %v688 = vmul.f32 %v594, 0.035677407
        %v689 = vmul.f32 %v599, 0.035677407
        %v690 = vmul.f32 %v604, 0.035677407
        %v691 = vmul.f32 %v609, 0.035677407
        %v692 = vmul.f32 %v614, 0.035677407
        %v693 = vmul.f32 %v619, 0.035677407
        %v694 = vmul.f32 %v624, 0.035677407
        %v695 = vmul.f32 %v629, 0.035677407
        %v696 = vmul.f32 %v664, %v474
        %v697 = vmul.f32 %v665, %v479
        %v698 = vmul.f32 %v666, %v484
        %v699 = vmul.f32 %v667, %v489
        %v700 = vmul.f32 %v668, %v494
        %v701 = vmul.f32 %v669, %v499
        %v702 = vmul.f32 %v670, %v504
        %v703 = vmul.f32 %v671, %v509
        %v704 = vmul.f32 %v672, %v514
        %v705 = vmul.f32 %v673, %v519
        %v706 = vmul.f32 %v674, %v524
        %v707 = vmul.f32 %v675, %v529
        %v708 = vmul.f32 %v676, %v534
        %v709 = vmul.f32 %v677, %v539
        %v710 = vmul.f32 %v678, %v544
        %v711 = vmul.f32 %v679, %v549
        %v712 = vmul.f32 %v680, %v554
        %v713 = vmul.f32 %v681, %v559
        %v714 = vmul.f32 %v682, %v564
        %v715 = vmul.f32 %v683, %v569
        %v716 = vmul.f32 %v684, %v574
        %v717 = vmul.f32 %v685, %v579
        %v718 = vmul.f32 %v686, %v584
        %v719 = vmul.f32 %v687, %v589
        %v720 = vmul.f32 %v688, %v594
        %v721 = vmul.f32 %v689, %v599
        %v722 = vmul.f32 %v690, %v604
        %v723 = vmul.f32 %v691, %v609
        %v724 = vmul.f32 %v692, %v614
        %v725 = vmul.f32 %v693, %v619
        %v726 = vmul.f32 %v694, %v624
        %v727 = vmul.f32 %v695, %v629
        %v728 = vadd.f32 %v696, 0.7978846
        %v729 = vadd.f32 %v697, 0.7978846
        %v730 = vadd.f32 %v698, 0.7978846
        %v731 = vadd.f32 %v699, 0.7978846
        %v732 = vadd.f32 %v700, 0.7978846
        %v733 = vadd.f32 %v701, 0.7978846
        %v734 = vadd.f32 %v702, 0.7978846
        %v735 = vadd.f32 %v703, 0.7978846
        %v736 = vadd.f32 %v704, 0.7978846
        %v737 = vadd.f32 %v705, 0.7978846
        %v738 = vadd.f32 %v706, 0.7978846
        %v739 = vadd.f32 %v707, 0.7978846
        %v740 = vadd.f32 %v708, 0.7978846
        %v741 = vadd.f32 %v709, 0.7978846
        %v742 = vadd.f32 %v710, 0.7978846
        %v743 = vadd.f32 %v711, 0.7978846
        %v744 = vadd.f32 %v712, 0.7978846
        %v745 = vadd.f32 %v713, 0.7978846
        %v746 = vadd.f32 %v714, 0.7978846
        %v747 = vadd.f32 %v715, 0.7978846
        %v748 = vadd.f32 %v716, 0.7978846
        %v749 = vadd.f32 %v717, 0.7978846
        %v750 = vadd.f32 %v718, 0.7978846
        %v751 = vadd.f32 %v719, 0.7978846
        %v752 = vadd.f32 %v720, 0.7978846
        %v753 = vadd.f32 %v721, 0.7978846
        %v754 = vadd.f32 %v722, 0.7978846
        %v755 = vadd.f32 %v723, 0.7978846
        %v756 = vadd.f32 %v724, 0.7978846
        %v757 = vadd.f32 %v725, 0.7978846
        %v758 = vadd.f32 %v726, 0.7978846
        %v759 = vadd.f32 %v727, 0.7978846
        %v760 = vmul.f32 %v474, %v728
        %v761 = vmul.f32 %v479, %v729
        %v762 = vmul.f32 %v484, %v730
        %v763 = vmul.f32 %v489, %v731
        %v764 = vmul.f32 %v494, %v732
        %v765 = vmul.f32 %v499, %v733
        %v766 = vmul.f32 %v504, %v734
        %v767 = vmul.f32 %v509, %v735
        %v768 = vmul.f32 %v514, %v736
        %v769 = vmul.f32 %v519, %v737
        %v770 = vmul.f32 %v524, %v738
        %v771 = vmul.f32 %v529, %v739
        %v772 = vmul.f32 %v534, %v740
        %v773 = vmul.f32 %v539, %v741
        %v774 = vmul.f32 %v544, %v742
        %v775 = vmul.f32 %v549, %v743
        %v776 = vmul.f32 %v554, %v744
        %v777 = vmul.f32 %v559, %v745
        %v778 = vmul.f32 %v564, %v746
        %v779 = vmul.f32 %v569, %v747
        %v780 = vmul.f32 %v574, %v748
        %v781 = vmul.f32 %v579, %v749
        %v782 = vmul.f32 %v584, %v750
        %v783 = vmul.f32 %v589, %v751
        %v784 = vmul.f32 %v594, %v752
        %v785 = vmul.f32 %v599, %v753
        %v786 = vmul.f32 %v604, %v754
        %v787 = vmul.f32 %v609, %v755
        %v788 = vmul.f32 %v614, %v756
        %v789 = vmul.f32 %v619, %v757
        %v790 = vmul.f32 %v624, %v758
        %v791 = vmul.f32 %v629, %v759
        %v792 = vtanh.pop %v760
        %v793 = vtanh.pop %v761
        %v794 = vtanh.pop %v762
        %v795 = vtanh.pop %v763
        %v796 = vtanh.pop %v764
        %v797 = vtanh.pop %v765
        %v798 = vtanh.pop %v766
        %v799 = vtanh.pop %v767
        %v800 = vtanh.pop %v768
        %v801 = vtanh.pop %v769
        %v802 = vtanh.pop %v770
        %v803 = vtanh.pop %v771
        %v804 = vtanh.pop %v772
        %v805 = vtanh.pop %v773
        %v806 = vtanh.pop %v774
        %v807 = vtanh.pop %v775
        %v808 = vtanh.pop %v776
        %v809 = vtanh.pop %v777
        %v810 = vtanh.pop %v778
        %v811 = vtanh.pop %v779
        %v812 = vtanh.pop %v780
        %v813 = vtanh.pop %v781
        %v814 = vtanh.pop %v782
        %v815 = vtanh.pop %v783
        %v816 = vtanh.pop %v784
        %v817 = vtanh.pop %v785
        %v818 = vtanh.pop %v786
        %v819 = vtanh.pop %v787
        %v820 = vtanh.pop %v788
        %v821 = vtanh.pop %v789
        %v822 = vtanh.pop %v790
        %v823 = vtanh.pop %v791
        %v824 = vadd.f32 %v792, 1.0
        %v825 = vadd.f32 %v793, 1.0
        %v826 = vadd.f32 %v794, 1.0
        %v827 = vadd.f32 %v795, 1.0
        %v828 = vadd.f32 %v796, 1.0
        %v829 = vadd.f32 %v797, 1.0
        %v830 = vadd.f32 %v798, 1.0
        %v831 = vadd.f32 %v799, 1.0
        %v832 = vadd.f32 %v800, 1.0
        %v833 = vadd.f32 %v801, 1.0
        %v834 = vadd.f32 %v802, 1.0
        %v835 = vadd.f32 %v803, 1.0
        %v836 = vadd.f32 %v804, 1.0
        %v837 = vadd.f32 %v805, 1.0
        %v838 = vadd.f32 %v806, 1.0
        %v839 = vadd.f32 %v807, 1.0
        %v840 = vadd.f32 %v808, 1.0
        %v841 = vadd.f32 %v809, 1.0
        %v842 = vadd.f32 %v810, 1.0
        %v843 = vadd.f32 %v811, 1.0
        %v844 = vadd.f32 %v812, 1.0
        %v845 = vadd.f32 %v813, 1.0
        %v846 = vadd.f32 %v814, 1.0
        %v847 = vadd.f32 %v815, 1.0
        %v848 = vadd.f32 %v816, 1.0
        %v849 = vadd.f32 %v817, 1.0
        %v850 = vadd.f32 %v818, 1.0
        %v851 = vadd.f32 %v819, 1.0
        %v852 = vadd.f32 %v820, 1.0
        %v853 = vadd.f32 %v821, 1.0
        %v854 = vadd.f32 %v822, 1.0
        %v855 = vadd.f32 %v823, 1.0
        %v856 = vmul.f32 %v632, %v824
        %v857 = vmul.f32 %v633, %v825
        %v858 = vmul.f32 %v634, %v826
        %v859 = vmul.f32 %v635, %v827
        %v860 = vmul.f32 %v636, %v828
        %v861 = vmul.f32 %v637, %v829
        %v862 = vmul.f32 %v638, %v830
        %v863 = vmul.f32 %v639, %v831
        %v864 = vmul.f32 %v640, %v832
        %v865 = vmul.f32 %v641, %v833
        %v866 = vmul.f32 %v642, %v834
        %v867 = vmul.f32 %v643, %v835
        %v868 = vmul.f32 %v644, %v836
        %v869 = vmul.f32 %v645, %v837
        %v870 = vmul.f32 %v646, %v838
        %v871 = vmul.f32 %v647, %v839
        %v872 = vmul.f32 %v648, %v840
        %v873 = vmul.f32 %v649, %v841
        %v874 = vmul.f32 %v650, %v842
        %v875 = vmul.f32 %v651, %v843
        %v876 = vmul.f32 %v652, %v844
        %v877 = vmul.f32 %v653, %v845
        %v878 = vmul.f32 %v654, %v846
        %v879 = vmul.f32 %v655, %v847
        %v880 = vmul.f32 %v656, %v848
        %v881 = vmul.f32 %v657, %v849
        %v882 = vmul.f32 %v658, %v850
        %v883 = vmul.f32 %v659, %v851
        %v884 = vmul.f32 %v660, %v852
        %v885 = vmul.f32 %v661, %v853
        %v886 = vmul.f32 %v662, %v854
        %v887 = vmul.f32 %v663, %v855
        %v888 = vld [vmem:[#allocation2] sm:$0xff]
        %v889 = vld [vmem:[#allocation2 + $0x8] sm:$0xff]
        %v890 = vld [vmem:[#allocation2 + $0x10] sm:$0xff]
        %v891 = vld [vmem:[#allocation2 + $0x18] sm:$0xff]
        %v892 = vld [vmem:[#allocation2 + $0x20] sm:$0xff]
        %v893 = vld [vmem:[#allocation2 + $0x28] sm:$0xff]
        %v894 = vld [vmem:[#allocation2 + $0x30] sm:$0xff]
        %v895 = vld [vmem:[#allocation2 + $0x38] sm:$0xff]
        %v896 = vld [vmem:[#allocation2 + $0x40] sm:$0xff]
        %v897 = vld [vmem:[#allocation2 + $0x48] sm:$0xff]
        %v898 = vld [vmem:[#allocation2 + $0x50] sm:$0xff]
        %v899 = vld [vmem:[#allocation2 + $0x58] sm:$0xff]
        %v900 = vld [vmem:[#allocation2 + $0x60] sm:$0xff]
        %v901 = vld [vmem:[#allocation2 + $0x68] sm:$0xff]
        %v902 = vld [vmem:[#allocation2 + $0x70] sm:$0xff]
        %v903 = vld [vmem:[#allocation2 + $0x78] sm:$0xff]
        %v904 = vld [vmem:[#allocation2 + $0x80] sm:$0xff]
        %v905 = vld [vmem:[#allocation2 + $0x88] sm:$0xff]
        %v906 = vld [vmem:[#allocation2 + $0x90] sm:$0xff]
        %v907 = vld [vmem:[#allocation2 + $0x98] sm:$0xff]
        %v908 = vld [vmem:[#allocation2 + $0xa0] sm:$0xff]
        %v909 = vld [vmem:[#allocation2 + $0xa8] sm:$0xff]
        %v910 = vld [vmem:[#allocation2 + $0xb0] sm:$0xff]
        %v911 = vld [vmem:[#allocation2 + $0xb8] sm:$0xff]
        %v912 = vld [vmem:[#allocation2 + $0xc0] sm:$0xff]
        %v913 = vld [vmem:[#allocation2 + $0xc8] sm:$0xff]
        %v914 = vld [vmem:[#allocation2 + $0xd0] sm:$0xff]
        %v915 = vld [vmem:[#allocation2 + $0xd8] sm:$0xff]
        %v916 = vld [vmem:[#allocation2 + $0xe0] sm:$0xff]
        %v917 = vld [vmem:[#allocation2 + $0xe8] sm:$0xff]
        %v918 = vld [vmem:[#allocation2 + $0xf0] sm:$0xff]
        %v919 = vld [vmem:[#allocation2 + $0xf8] sm:$0xff]
        %v920 = vld [vmem:[#allocation8] sm:$0xff]
        %v921 = vld [vmem:[#allocation8 + $0x8] sm:$0xff]
        %v922 = vld [vmem:[#allocation8 + $0x10] sm:$0xff]
        %v923 = vld [vmem:[#allocation8 + $0x18] sm:$0xff]
        %v924 = vld [vmem:[#allocation8 + $0x20] sm:$0xff]
        %v925 = vld [vmem:[#allocation8 + $0x28] sm:$0xff]
        %v926 = vld [vmem:[#allocation8 + $0x30] sm:$0xff]
        %v927 = vld [vmem:[#allocation8 + $0x38] sm:$0xff]
        %v928 = vld [vmem:[#allocation8 + $0x40] sm:$0xff]
        %v929 = vld [vmem:[#allocation8 + $0x48] sm:$0xff]
        %v930 = vld [vmem:[#allocation8 + $0x50] sm:$0xff]
        %v931 = vld [vmem:[#allocation8 + $0x58] sm:$0xff]
        %v932 = vld [vmem:[#allocation8 + $0x60] sm:$0xff]
        %v933 = vld [vmem:[#allocation8 + $0x68] sm:$0xff]
        %v934 = vld [vmem:[#allocation8 + $0x70] sm:$0xff]
        %v935 = vld [vmem:[#allocation8 + $0x78] sm:$0xff]
        %936 = vmatprep.subr.mxu0 0.0
        %937 = vmatpush1.msra.mxu0 %v920
        %938 = vmatprep.subr.mxu0 0.0
        %939 = vmatpush1.msra.mxu0 %v921
        %940 = vmatprep.subr.mxu0 0.0
        %941 = vmatpush1.msra.mxu0 %v922
        %942 = vmatprep.subr.mxu0 0.0
        %943 = vmatpush1.msra.mxu0 %v923
        %944 = vmatprep.subr.mxu0 0.0
        %945 = vmatpush1.msra.mxu0 %v924
        %946 = vmatprep.subr.mxu0 0.0
        %947 = vmatpush1.msra.mxu0 %v925
        %948 = vmatprep.subr.mxu0 0.0
        %949 = vmatpush1.msra.mxu0 %v926
        %950 = vmatprep.subr.mxu0 0.0
        %951 = vmatpush1.msra.mxu0 %v927
        %952 = vmatprep.subr.mxu0 0.0
        %953 = vmatpush1.msra.mxu0 %v928
        %954 = vmatprep.subr.mxu0 0.0
        %955 = vmatpush1.msra.mxu0 %v929
        %956 = vmatprep.subr.mxu0 0.0
        %957 = vmatpush1.msra.mxu0 %v930
        %958 = vmatprep.subr.mxu0 0.0
        %959 = vmatpush1.msra.mxu0 %v931
        %960 = vmatprep.subr.mxu0 0.0
        %961 = vmatpush1.msra.mxu0 %v932
        %962 = vmatprep.subr.mxu0 0.0
        %963 = vmatpush1.msra.mxu0 %v933
        %964 = vmatprep.subr.mxu0 0.0
        %965 = vmatpush1.msra.mxu0 %v934
        %966 = vmatprep.subr.mxu0 0.0
        %967 = vmatpush1.msra.mxu0 %v935
        %968 = vmatprep.subr.mxu0 0.0
        %969 = vmatpush1.msra.mxu0 0.0
        %970 = vmatprep.subr.mxu0 0.0
        %971 = vmatpush1.msra.mxu0 0.0
        %972 = vmatprep.subr.mxu0 0.0
        %973 = vmatpush1.msra.mxu0 0.0
        %974 = vmatprep.subr.mxu0 0.0
        %975 = vmatpush1.msra.mxu0 0.0
        %976 = vmatprep.subr.mxu0 0.0
        %977 = vmatpush1.msra.mxu0 0.0
        %978 = vmatprep.subr.mxu0 0.0
        %979 = vmatpush1.msra.mxu0 0.0
        %980 = vmatprep.subr.mxu0 0.0
        %981 = vmatpush1.msra.mxu0 0.0
        %982 = vmatprep.subr.mxu0 0.0
        %983 = vmatpush1.msra.mxu0 0.0
        %984 = vmatprep.subr.mxu0 0.0
        %985 = vmatpush1.msra.mxu0 0.0
        %986 = vmatprep.subr.mxu0 0.0
        %987 = vmatpush1.msra.mxu0 0.0
        %988 = vmatprep.subr.mxu0 0.0
        %989 = vmatpush1.msra.mxu0 0.0
        %990 = vmatprep.subr.mxu0 0.0
        %991 = vmatpush1.msra.mxu0 0.0
        %992 = vmatprep.subr.mxu0 0.0
        %993 = vmatpush1.msra.mxu0 0.0
        %994 = vmatprep.subr.mxu0 0.0
        %995 = vmatpush1.msra.mxu0 0.0
        %996 = vmatprep.subr.mxu0 0.0
        %997 = vmatpush1.msra.mxu0 0.0
        %998 = vmatprep.subr.mxu0 0.0
        %999 = vmatpush1.msra.mxu0 0.0
        %1000 = vmatprep.mubr.f32.mxu0 0.0
        %1001 = vmatmul.mubr.f32.gmra.mrb[0].mxu0 %v856
        %v1002 = vpop.f32.mrb[0].mxu0
        %v1003 = vadd.f32 0.0, %v1002
        %v1004 = vpop.f32.mrb[0].mxu0
        %1005 = vmatprep.mubr.f32.mxu0 0.0
        %1006 = vmatmul.mubr.f32.gmra.mrb[0].mxu0 %v857
        %v1007 = vpop.f32.mrb[0].mxu0
        %v1008 = vadd.f32 0.0, %v1007
        %v1009 = vpop.f32.mrb[0].mxu0
        %1010 = vmatprep.mubr.f32.mxu0 0.0
        %1011 = vmatmul.mubr.f32.gmra.mrb[0].mxu0 %v858
        %v1012 = vpop.f32.mrb[0].mxu0
        %v1013 = vadd.f32 0.0, %v1012
        %v1014 = vpop.f32.mrb[0].mxu0
        %1015 = vmatprep.mubr.f32.mxu0 0.0
        %1016 = vmatmul.mubr.f32.gmra.mrb[0].mxu0 %v859
        %v1017 = vpop.f32.mrb[0].mxu0
        %v1018 = vadd.f32 0.0, %v1017
        %v1019 = vpop.f32.mrb[0].mxu0
        %1020 = vmatprep.mubr.f32.mxu0 0.0
        %1021 = vmatmul.mubr.f32.gmra.mrb[0].mxu0 %v860
        %v1022 = vpop.f32.mrb[0].mxu0
        %v1023 = vadd.f32 0.0, %v1022
        %v1024 = vpop.f32.mrb[0].mxu0
        %1025 = vmatprep.mubr.f32.mxu0 0.0
        %1026 = vmatmul.mubr.f32.gmra.mrb[0].mxu0 %v861
        %v1027 = vpop.f32.mrb[0].mxu0
        %v1028 = vadd.f32 0.0, %v1027
        %v1029 = vpop.f32.mrb[0].mxu0
        %1030 = vmatprep.mubr.f32.mxu0 0.0
        %1031 = vmatmul.mubr.f32.gmra.mrb[0].mxu0 %v862
        %v1032 = vpop.f32.mrb[0].mxu0
        %v1033 = vadd.f32 0.0, %v1032
        %v1034 = vpop.f32.mrb[0].mxu0
        %1035 = vmatprep.mubr.f32.mxu0 0.0
        %1036 = vmatmul.mubr.f32.gmra.mrb[0].mxu0 %v863
        %v1037 = vpop.f32.mrb[0].mxu0
        %v1038 = vadd.f32 0.0, %v1037
        %v1039 = vpop.f32.mrb[0].mxu0
        %1040 = vmatprep.mubr.f32.mxu0 0.0
        %1041 = vmatmul.mubr.f32.gmra.mrb[0].mxu0 %v864
        %v1042 = vpop.f32.mrb[0].mxu0
        %v1043 = vadd.f32 0.0, %v1042
        %v1044 = vpop.f32.mrb[0].mxu0
        %1045 = vmatprep.mubr.f32.mxu0 0.0
        %1046 = vmatmul.mubr.f32.gmra.mrb[0].mxu0 %v865
        %v1047 = vpop.f32.mrb[0].mxu0
        %v1048 = vadd.f32 0.0, %v1047
        %v1049 = vpop.f32.mrb[0].mxu0
        %1050 = vmatprep.mubr.f32.mxu0 0.0
        %1051 = vmatmul.mubr.f32.gmra.mrb[0].mxu0 %v866
        %v1052 = vpop.f32.mrb[0].mxu0
        %v1053 = vadd.f32 0.0, %v1052
        %v1054 = vpop.f32.mrb[0].mxu0
        %1055 = vmatprep.mubr.f32.mxu0 0.0
        %1056 = vmatmul.mubr.f32.gmra.mrb[0].mxu0 %v867
        %v1057 = vpop.f32.mrb[0].mxu0
        %v1058 = vadd.f32 0.0, %v1057
        %v1059 = vpop.f32.mrb[0].mxu0
        %1060 = vmatprep.mubr.f32.mxu0 0.0
        %1061 = vmatmul.mubr.f32.gmra.mrb[0].mxu0 %v868
        %v1062 = vpop.f32.mrb[0].mxu0
        %v1063 = vadd.f32 0.0, %v1062
        %v1064 = vpop.f32.mrb[0].mxu0
        %1065 = vmatprep.mubr.f32.mxu0 0.0
        %1066 = vmatmul.mubr.f32.gmra.mrb[0].mxu0 %v869
        %v1067 = vpop.f32.mrb[0].mxu0
        %v1068 = vadd.f32 0.0, %v1067
        %v1069 = vpop.f32.mrb[0].mxu0
        %1070 = vmatprep.mubr.f32.mxu0 0.0
        %1071 = vmatmul.mubr.f32.gmra.mrb[0].mxu0 %v870
        %v1072 = vpop.f32.mrb[0].mxu0
        %v1073 = vadd.f32 0.0, %v1072
        %v1074 = vpop.f32.mrb[0].mxu0
        %1075 = vmatprep.mubr.f32.mxu0 0.0
        %1076 = vmatmul.mubr.f32.gmra.mrb[0].mxu0 %v871
        %v1077 = vpop.f32.mrb[0].mxu0
        %v1078 = vadd.f32 0.0, %v1077
        %v1079 = vpop.f32.mrb[0].mxu0
        %1080 = vmatprep.mubr.f32.mxu0 0.0
        %1081 = vmatmul.mubr.f32.gmra.mrb[0].mxu0 %v872
        %v1082 = vpop.f32.mrb[0].mxu0
        %v1083 = vadd.f32 0.0, %v1082
        %v1084 = vpop.f32.mrb[0].mxu0
        %1085 = vmatprep.mubr.f32.mxu0 0.0
        %1086 = vmatmul.mubr.f32.gmra.mrb[0].mxu0 %v873
        %v1087 = vpop.f32.mrb[0].mxu0
        %v1088 = vadd.f32 0.0, %v1087
        %v1089 = vpop.f32.mrb[0].mxu0
        %1090 = vmatprep.mubr.f32.mxu0 0.0
        %1091 = vmatmul.mubr.f32.gmra.mrb[0].mxu0 %v874
        %v1092 = vpop.f32.mrb[0].mxu0
        %v1093 = vadd.f32 0.0, %v1092
        %v1094 = vpop.f32.mrb[0].mxu0
        %1095 = vmatprep.mubr.f32.mxu0 0.0
        %1096 = vmatmul.mubr.f32.gmra.mrb[0].mxu0 %v875
        %v1097 = vpop.f32.mrb[0].mxu0
        %v1098 = vadd.f32 0.0, %v1097
        %v1099 = vpop.f32.mrb[0].mxu0
        %1100 = vmatprep.mubr.f32.mxu0 0.0
        %1101 = vmatmul.mubr.f32.gmra.mrb[0].mxu0 %v876
        %v1102 = vpop.f32.mrb[0].mxu0
        %v1103 = vadd.f32 0.0, %v1102
        %v1104 = vpop.f32.mrb[0].mxu0
        %1105 = vmatprep.mubr.f32.mxu0 0.0
        %1106 = vmatmul.mubr.f32.gmra.mrb[0].mxu0 %v877
        %v1107 = vpop.f32.mrb[0].mxu0
        %v1108 = vadd.f32 0.0, %v1107
        %v1109 = vpop.f32.mrb[0].mxu0
        %1110 = vmatprep.mubr.f32.mxu0 0.0
        %1111 = vmatmul.mubr.f32.gmra.mrb[0].mxu0 %v878
        %v1112 = vpop.f32.mrb[0].mxu0
        %v1113 = vadd.f32 0.0, %v1112
        %v1114 = vpop.f32.mrb[0].mxu0
        %1115 = vmatprep.mubr.f32.mxu0 0.0
        %1116 = vmatmul.mubr.f32.gmra.mrb[0].mxu0 %v879
        %v1117 = vpop.f32.mrb[0].mxu0
        %v1118 = vadd.f32 0.0, %v1117
        %v1119 = vpop.f32.mrb[0].mxu0
        %1120 = vmatprep.mubr.f32.mxu0 0.0
        %1121 = vmatmul.mubr.f32.gmra.mrb[0].mxu0 %v880
        %v1122 = vpop.f32.mrb[0].mxu0
        %v1123 = vadd.f32 0.0, %v1122
        %v1124 = vpop.f32.mrb[0].mxu0
        %1125 = vmatprep.mubr.f32.mxu0 0.0
        %1126 = vmatmul.mubr.f32.gmra.mrb[0].mxu0 %v881
        %v1127 = vpop.f32.mrb[0].mxu0
        %v1128 = vadd.f32 0.0, %v1127
        %v1129 = vpop.f32.mrb[0].mxu0
        %1130 = vmatprep.mubr.f32.mxu0 0.0
        %1131 = vmatmul.mubr.f32.gmra.mrb[0].mxu0 %v882
        %v1132 = vpop.f32.mrb[0].mxu0
        %v1133 = vadd.f32 0.0, %v1132
        %v1134 = vpop.f32.mrb[0].mxu0
        %1135 = vmatprep.mubr.f32.mxu0 0.0
        %1136 = vmatmul.mubr.f32.gmra.mrb[0].mxu0 %v883
        %v1137 = vpop.f32.mrb[0].mxu0
        %v1138 = vadd.f32 0.0, %v1137
        %v1139 = vpop.f32.mrb[0].mxu0
        %1140 = vmatprep.mubr.f32.mxu0 0.0
        %1141 = vmatmul.mubr.f32.gmra.mrb[0].mxu0 %v884
        %v1142 = vpop.f32.mrb[0].mxu0
        %v1143 = vadd.f32 0.0, %v1142
        %v1144 = vpop.f32.mrb[0].mxu0
        %1145 = vmatprep.mubr.f32.mxu0 0.0
        %1146 = vmatmul.mubr.f32.gmra.mrb[0].mxu0 %v885
        %v1147 = vpop.f32.mrb[0].mxu0
        %v1148 = vadd.f32 0.0, %v1147
        %v1149 = vpop.f32.mrb[0].mxu0
        %1150 = vmatprep.mubr.f32.mxu0 0.0
        %1151 = vmatmul.mubr.f32.gmra.mrb[0].mxu0 %v886
        %v1152 = vpop.f32.mrb[0].mxu0
        %v1153 = vadd.f32 0.0, %v1152
        %v1154 = vpop.f32.mrb[0].mxu0
        %1155 = vmatprep.mubr.f32.mxu0 0.0
        %1156 = vmatmul.mubr.f32.gmra.mrb[0].mxu0 %v887
        %v1157 = vpop.f32.mrb[0].mxu0
        %v1158 = vadd.f32 0.0, %v1157
        %v1159 = vpop.f32.mrb[0].mxu0
        %1160 = vdwg.mxu0
        %v1161 = vadd.f32 %v888, %v1003
        %v1162 = vadd.f32 %v889, %v1008
        %v1163 = vadd.f32 %v890, %v1013
        %v1164 = vadd.f32 %v891, %v1018
        %v1165 = vadd.f32 %v892, %v1023
        %v1166 = vadd.f32 %v893, %v1028
        %v1167 = vadd.f32 %v894, %v1033
        %v1168 = vadd.f32 %v895, %v1038
        %v1169 = vadd.f32 %v896, %v1043
        %v1170 = vadd.f32 %v897, %v1048
        %v1171 = vadd.f32 %v898, %v1053
        %v1172 = vadd.f32 %v899, %v1058
        %v1173 = vadd.f32 %v900, %v1063
        %v1174 = vadd.f32 %v901, %v1068
        %v1175 = vadd.f32 %v902, %v1073
        %v1176 = vadd.f32 %v903, %v1078
        %v1177 = vadd.f32 %v904, %v1083
        %v1178 = vadd.f32 %v905, %v1088
        %v1179 = vadd.f32 %v906, %v1093
        %v1180 = vadd.f32 %v907, %v1098
        %v1181 = vadd.f32 %v908, %v1103
        %v1182 = vadd.f32 %v909, %v1108
        %v1183 = vadd.f32 %v910, %v1113
        %v1184 = vadd.f32 %v911, %v1118
        %v1185 = vadd.f32 %v912, %v1123
        %v1186 = vadd.f32 %v913, %v1128
        %v1187 = vadd.f32 %v914, %v1133
        %v1188 = vadd.f32 %v915, %v1138
        %v1189 = vadd.f32 %v916, %v1143
        %v1190 = vadd.f32 %v917, %v1148
        %v1191 = vadd.f32 %v918, %v1153
        %v1192 = vadd.f32 %v919, %v1158
        %1193 = vst [vmem:[#allocation2] sm:$0xff] %v1161
        %1194 = vst [vmem:[#allocation2 + $0x8] sm:$0xff] %v1162
        %1195 = vst [vmem:[#allocation2 + $0x10] sm:$0xff] %v1163
        %1196 = vst [vmem:[#allocation2 + $0x18] sm:$0xff] %v1164
        %1197 = vst [vmem:[#allocation2 + $0x20] sm:$0xff] %v1165
        %1198 = vst [vmem:[#allocation2 + $0x28] sm:$0xff] %v1166
        %1199 = vst [vmem:[#allocation2 + $0x30] sm:$0xff] %v1167
        %1200 = vst [vmem:[#allocation2 + $0x38] sm:$0xff] %v1168
        %1201 = vst [vmem:[#allocation2 + $0x40] sm:$0xff] %v1169
        %1202 = vst [vmem:[#allocation2 + $0x48] sm:$0xff] %v1170
        %1203 = vst [vmem:[#allocation2 + $0x50] sm:$0xff] %v1171
        %1204 = vst [vmem:[#allocation2 + $0x58] sm:$0xff] %v1172
        %1205 = vst [vmem:[#allocation2 + $0x60] sm:$0xff] %v1173
        %1206 = vst [vmem:[#allocation2 + $0x68] sm:$0xff] %v1174
        %1207 = vst [vmem:[#allocation2 + $0x70] sm:$0xff] %v1175
        %1208 = vst [vmem:[#allocation2 + $0x78] sm:$0xff] %v1176
        %1209 = vst [vmem:[#allocation2 + $0x80] sm:$0xff] %v1177
        %1210 = vst [vmem:[#allocation2 + $0x88] sm:$0xff] %v1178
        %1211 = vst [vmem:[#allocation2 + $0x90] sm:$0xff] %v1179
        %1212 = vst [vmem:[#allocation2 + $0x98] sm:$0xff] %v1180
        %1213 = vst [vmem:[#allocation2 + $0xa0] sm:$0xff] %v1181
        %1214 = vst [vmem:[#allocation2 + $0xa8] sm:$0xff] %v1182
        %1215 = vst [vmem:[#allocation2 + $0xb0] sm:$0xff] %v1183
        %1216 = vst [vmem:[#allocation2 + $0xb8] sm:$0xff] %v1184
        %1217 = vst [vmem:[#allocation2 + $0xc0] sm:$0xff] %v1185
        %1218 = vst [vmem:[#allocation2 + $0xc8] sm:$0xff] %v1186
        %1219 = vst [vmem:[#allocation2 + $0xd0] sm:$0xff] %v1187
        %1220 = vst [vmem:[#allocation2 + $0xd8] sm:$0xff] %v1188
        %1221 = vst [vmem:[#allocation2 + $0xe0] sm:$0xff] %v1189
        %1222 = vst [vmem:[#allocation2 + $0xe8] sm:$0xff] %v1190
        %1223 = vst [vmem:[#allocation2 + $0xf0] sm:$0xff] %v1191
        %1224 = vst [vmem:[#allocation2 + $0xf8] sm:$0xff] %v1192
        // Predicated region
        $region57: #{tpu_custom_call.1} parent=39 // pred_check
          %p1225 = pneg %p316
        $region58: #{tpu_custom_call.1} parent=39 // pred_check_branch
          %1227 = sbr.rel (%p1225) target = $region60
        $region59: #{tpu_custom_call.1} parent=39 // pred_region
          %v1228 = vld [vmem:[#allocation2] sm:$0xff]
          %v1229 = vld [vmem:[#allocation2 + $0x8] sm:$0xff]
          %v1230 = vld [vmem:[#allocation2 + $0x10] sm:$0xff]
          %v1231 = vld [vmem:[#allocation2 + $0x18] sm:$0xff]
          %v1232 = vld [vmem:[#allocation2 + $0x20] sm:$0xff]
          %v1233 = vld [vmem:[#allocation2 + $0x28] sm:$0xff]
          %v1234 = vld [vmem:[#allocation2 + $0x30] sm:$0xff]
          %v1235 = vld [vmem:[#allocation2 + $0x38] sm:$0xff]
          %v1236 = vld [vmem:[#allocation2 + $0x40] sm:$0xff]
          %v1237 = vld [vmem:[#allocation2 + $0x48] sm:$0xff]
          %v1238 = vld [vmem:[#allocation2 + $0x50] sm:$0xff]
          %v1239 = vld [vmem:[#allocation2 + $0x58] sm:$0xff]
          %v1240 = vld [vmem:[#allocation2 + $0x60] sm:$0xff]
          %v1241 = vld [vmem:[#allocation2 + $0x68] sm:$0xff]
          %v1242 = vld [vmem:[#allocation2 + $0x70] sm:$0xff]
          %v1243 = vld [vmem:[#allocation2 + $0x78] sm:$0xff]
          %v1244 = vld [vmem:[#allocation2 + $0x80] sm:$0xff]
          %v1245 = vld [vmem:[#allocation2 + $0x88] sm:$0xff]
          %v1246 = vld [vmem:[#allocation2 + $0x90] sm:$0xff]
          %v1247 = vld [vmem:[#allocation2 + $0x98] sm:$0xff]
          %v1248 = vld [vmem:[#allocation2 + $0xa0] sm:$0xff]
          %v1249 = vld [vmem:[#allocation2 + $0xa8] sm:$0xff]
          %v1250 = vld [vmem:[#allocation2 + $0xb0] sm:$0xff]
          %v1251 = vld [vmem:[#allocation2 + $0xb8] sm:$0xff]
          %v1252 = vld [vmem:[#allocation2 + $0xc0] sm:$0xff]
          %v1253 = vld [vmem:[#allocation2 + $0xc8] sm:$0xff]
          %v1254 = vld [vmem:[#allocation2 + $0xd0] sm:$0xff]
          %v1255 = vld [vmem:[#allocation2 + $0xd8] sm:$0xff]
          %v1256 = vld [vmem:[#allocation2 + $0xe0] sm:$0xff]
          %v1257 = vld [vmem:[#allocation2 + $0xe8] sm:$0xff]
          %v1258 = vld [vmem:[#allocation2 + $0xf0] sm:$0xff]
          %v1259 = vld [vmem:[#allocation2 + $0xf8] sm:$0xff]
          %v1260 = vld [vmem:[%s4] sm:$0x1]
          %v1262 = vlaneseq
          %v1263 = vshrl.u32 %v1262, 7
          %v1264 = vsub.s32 0, %v1263
          %v1265 = vrot.slane %v1260, %v1264
          %v1267 = vadd.f32 %v1228, %v1265
          %v1268 = vadd.f32 %v1229, %v1265
          %v1269 = vadd.f32 %v1230, %v1265
          %v1270 = vadd.f32 %v1231, %v1265
          %v1271 = vadd.f32 %v1232, %v1265
          %v1272 = vadd.f32 %v1233, %v1265
          %v1273 = vadd.f32 %v1234, %v1265
          %v1274 = vadd.f32 %v1235, %v1265
          %v1275 = vadd.f32 %v1236, %v1265
          %v1276 = vadd.f32 %v1237, %v1265
          %v1277 = vadd.f32 %v1238, %v1265
          %v1278 = vadd.f32 %v1239, %v1265
          %v1279 = vadd.f32 %v1240, %v1265
          %v1280 = vadd.f32 %v1241, %v1265
          %v1281 = vadd.f32 %v1242, %v1265
          %v1282 = vadd.f32 %v1243, %v1265
          %v1283 = vadd.f32 %v1244, %v1265
          %v1284 = vadd.f32 %v1245, %v1265
          %v1285 = vadd.f32 %v1246, %v1265
          %v1286 = vadd.f32 %v1247, %v1265
          %v1287 = vadd.f32 %v1248, %v1265
          %v1288 = vadd.f32 %v1249, %v1265
          %v1289 = vadd.f32 %v1250, %v1265
          %v1290 = vadd.f32 %v1251, %v1265
          %v1291 = vadd.f32 %v1252, %v1265
          %v1292 = vadd.f32 %v1253, %v1265
          %v1293 = vadd.f32 %v1254, %v1265
          %v1294 = vadd.f32 %v1255, %v1265
          %v1295 = vadd.f32 %v1256, %v1265
          %v1296 = vadd.f32 %v1257, %v1265
          %v1297 = vadd.f32 %v1258, %v1265
          %v1298 = vadd.f32 %v1259, %v1265
          %1299 = vst [vmem:[%s309] sm:$0xff] %v1267
          %1300 = vst [vmem:[%s309 + $0x8] sm:$0xff] %v1268
          %1301 = vst [vmem:[%s309 + $0x10] sm:$0xff] %v1269
          %1302 = vst [vmem:[%s309 + $0x18] sm:$0xff] %v1270
          %1303 = vst [vmem:[%s309 + $0x20] sm:$0xff] %v1271
          %1304 = vst [vmem:[%s309 + $0x28] sm:$0xff] %v1272
          %1305 = vst [vmem:[%s309 + $0x30] sm:$0xff] %v1273
          %1306 = vst [vmem:[%s309 + $0x38] sm:$0xff] %v1274
          %1307 = vst [vmem:[%s309 + $0x40] sm:$0xff] %v1275
          %1308 = vst [vmem:[%s309 + $0x48] sm:$0xff] %v1276
          %1309 = vst [vmem:[%s309 + $0x50] sm:$0xff] %v1277
          %1310 = vst [vmem:[%s309 + $0x58] sm:$0xff] %v1278
          %1311 = vst [vmem:[%s309 + $0x60] sm:$0xff] %v1279
          %1312 = vst [vmem:[%s309 + $0x68] sm:$0xff] %v1280
          %1313 = vst [vmem:[%s309 + $0x70] sm:$0xff] %v1281
          %1314 = vst [vmem:[%s309 + $0x78] sm:$0xff] %v1282
          %1315 = vst [vmem:[%s309 + $0x80] sm:$0xff] %v1283
          %1316 = vst [vmem:[%s309 + $0x88] sm:$0xff] %v1284
          %1317 = vst [vmem:[%s309 + $0x90] sm:$0xff] %v1285
          %1318 = vst [vmem:[%s309 + $0x98] sm:$0xff] %v1286
          %1319 = vst [vmem:[%s309 + $0xa0] sm:$0xff] %v1287
          %1320 = vst [vmem:[%s309 + $0xa8] sm:$0xff] %v1288
          %1321 = vst [vmem:[%s309 + $0xb0] sm:$0xff] %v1289
          %1322 = vst [vmem:[%s309 + $0xb8] sm:$0xff] %v1290
          %1323 = vst [vmem:[%s309 + $0xc0] sm:$0xff] %v1291
          %1324 = vst [vmem:[%s309 + $0xc8] sm:$0xff] %v1292
          %1325 = vst [vmem:[%s309 + $0xd0] sm:$0xff] %v1293
          %1326 = vst [vmem:[%s309 + $0xd8] sm:$0xff] %v1294
          %1327 = vst [vmem:[%s309 + $0xe0] sm:$0xff] %v1295
          %1328 = vst [vmem:[%s309 + $0xe8] sm:$0xff] %v1296
          %1329 = vst [vmem:[%s309 + $0xf0] sm:$0xff] %v1297
          %1330 = vst [vmem:[%s309 + $0xf8] sm:$0xff] %v1298
        $region60: #{tpu_custom_call.1} parent=39 // pred_fallthru
          _
        %s1331 = sand.u32 %s168, 1
        %s1332 = scalar_lea.sflag [#allocation5], %s1331
        %s1333 = sand.u32 %s168, 1
        %s1334 = smul.addr %s1333, 256
        %s1335 = scalar_lea.vmem [#allocation9], %s1334
        // Predicated region
        $region61: #{tpu_custom_call.1} parent=39 // pred_check
          %p1336 = pneg %p178
        $region62: #{tpu_custom_call.1} parent=39 // pred_check_branch
          %1338 = sbr.rel (%p1336) target = $region64
        $region63: #{tpu_custom_call.1} parent=39 // pred_region
          %s1339 = smul.u32 32, %s27
          %s1341 = ssub.s32 4096, 4096
          %1342 = vsyncadd %s1332, %s1341
          %s1343 = smul.addr %s1339, 128
          %s1344 = scalar_lea.hbm %s5, %s1343
          %s1345 = sshll.u32 %s1335, 4
          %s1346 = int_to_ptr.vmem [resolvable:$true] %s1345
          %1351 = dma.vmem_to_hbm [thread:$0]  %s1346, 4096, %s1344, %s1332, 128, 128, 8
        $region64: #{tpu_custom_call.1} parent=39 // pred_fallthru
          _
      $region40: #{tpu_custom_call.1} parent=5 // pred_fallthru
        _
      %p1352 = scmp.le.s32.totalorder 2, %s18
      // Predicated region
      $region65: #{tpu_custom_call.1} parent=5 // pred_check
        %p1353 = pneg %p1352
      $region66: #{tpu_custom_call.1} parent=5 // pred_check_branch
        %1355 = sbr.rel (%p1353) target = $region68
      $region67: #{tpu_custom_call.1} parent=5 // pred_region
        %s1356 = ssub.s32 %s18, 2
        // Predicated region
        $region69: #{tpu_custom_call.1} parent=67 // pred_check
          %p1357 = pneg %p184
        $region70: #{tpu_custom_call.1} parent=67 // pred_check_branch
          %1359 = sbr.rel (%p1357) target = $region72
        $region71: #{tpu_custom_call.1} parent=67 // pred_region
          %s1360 = sand.u32 %s169, 1
          %s1361 = scalar_lea.sflag [#allocation5], %s1360
          %s1362 = sand.u32 %s169, 1
          %s1363 = smul.addr %s1362, 256
          %s1364 = scalar_lea.vmem [#allocation9], %s1363
          %1365 = dma.done %s1361, 4096
        $region72: #{tpu_custom_call.1} parent=67 // pred_fallthru
          _
      $region68: #{tpu_custom_call.1} parent=5 // pred_fallthru
        _
    $region6: #{tpu_custom_call.1} parent=1 // loop_footer
      %s22 = sadd.s32 1, %s18
    $region7: #{tpu_custom_call.1} parent=1 // loop_footer_branch
      %17 = sbr.rel target = $region3
    $region8: #{tpu_custom_call.1} parent=1 // loop_exit
      _
    %1366 = vsyncpa [#allocation4], 1
    %s1367 = scalar_lea.sflag [#allocation4], 1
    %1368 = vsyncpa %s1367, 1
    %1369 = vsyncpa [#allocation7], 1
    %1370 = vsyncpa [#allocation5], 1
    %s1371 = scalar_lea.sflag [#allocation5], 1
    %1372 = vsyncpa %s1371, 1

</llo_original>
